<compile_context>
chip_gen: v5e
topology: v5e:2x2
jax: 0.10.0
libtpu: 0.0.40
codegen_flags: <defaults>
</compile_context>

<pallas_src>
import jax
import jax.numpy as jnp
from jax.experimental import pallas as pl
from jax.experimental.pallas import tpu as pltpu


# ----------------------------------------------------------------------------
# Pallas kernel: one batch tile of the whole dense forward
#   h1  = relu(state @ W1 + b1)                              [TB, 64]
#   h2  = relu(h1 @ W2_top + action @ W2_act + b2)           [TB, 256]
#   out = h2 @ W3_pad + b3                                   [TB, 8] (padded)
# All matmuls: bf16 operands, f32 accumulation (MXU-native).
# ----------------------------------------------------------------------------
def joint_critic_kernel(state_ref, action_ref, w1_ref, w2t_ref, w2a_ref,
                        w3_ref, b_ref, out_ref):
    d0 = w1_ref.shape[1]        # 64
    n_out = out_ref.shape[1]    # 8 (narrow lane-padded output width)

    # Layer 1: relu(state @ W1 + b1); in-kernel bf16 cast, f32 accumulate.
    s = state_ref[...].astype(jnp.bfloat16)
    h1 = jnp.dot(s, w1_ref[...], preferred_element_type=jnp.float32)
    h1 = jnp.maximum(h1 + b_ref[0:1, 0:d0], 0.0)

    # Layer 2: split matmul replaces torch.cat([h1, action]) @ W2.
    a = action_ref[...].astype(jnp.bfloat16)
    h2 = jnp.dot(h1.astype(jnp.bfloat16), w2t_ref[...],
                 preferred_element_type=jnp.float32)
    h2 = h2 + jnp.dot(a, w2a_ref[...], preferred_element_type=jnp.float32)
    h2 = jnp.maximum(h2 + b_ref[1:2, :], 0.0)

    # Output layer (no activation); padded columns multiply zero weight cols.
    out = jnp.dot(h2.astype(jnp.bfloat16), w3_ref[...],
                  preferred_element_type=jnp.float32)
    out_ref[...] = (out + b_ref[2:3, 0:n_out]).astype(out_ref.dtype)


# ----------------------------------------------------------------------------
# Tile selection: few fat steps, sublane-aligned, >= 2 parallel steps for v7x
# when the batch is large enough, <= max_tile for v5e scoped-VMEM headroom.
# ----------------------------------------------------------------------------
def _choose_batch_tile(b_pad, max_tile=2048):
    if b_pad <= max_tile:
        if b_pad >= 512 and (b_pad // 2) % 8 == 0:
            return b_pad // 2            # 2 parallel steps (v7x: both TCs busy)
        return b_pad                     # single step for small batches
    nb = pl.cdiv(b_pad, max_tile)
    if nb % 2:
        nb += 1                          # even number of parallel steps
    return ((pl.cdiv(b_pad, nb) + 7) // 8) * 8


# ----------------------------------------------------------------------------
# Wrapper (jit this whole thing): batch-tiled grid, weights VMEM-resident via
# constant index_maps (weight-stationary streaming matmul).
# ----------------------------------------------------------------------------
def joint_critic_forward(state, action, kernel_params, *, num_instances,
                         max_tile=2048):
    w1, w2_top, w2_act, w3_pad, biases = kernel_params
    n_pad = w3_pad.shape[1]

    B = state.shape[0]
    full_state = state.shape[1]
    full_action = action.shape[1]

    b_pad = ((B + 7) // 8) * 8
    tile = _choose_batch_tile(b_pad, max_tile)
    nb = pl.cdiv(b_pad, tile)
    b_total = nb * tile

    # Only pad when the batch is not tile-aligned (rare; fuses under jit).
    if b_total != B:
        state = jnp.pad(state, ((0, b_total - B), (0, 0)))
        action = jnp.pad(action, ((0, b_total - B), (0, 0)))

    out = pl.pallas_call(
        joint_critic_kernel,
        out_shape=jax.ShapeDtypeStruct((b_total, n_pad), jnp.float32),
        grid=(nb,),
        in_specs=[
            # Activations: one batch tile per grid step (raw f32, true widths).
            pl.BlockSpec((tile, full_state), lambda i: (i, 0)),
            pl.BlockSpec((tile, full_action), lambda i: (i, 0)),
            # Weights / biases: constant block index -> resident across grid.
            pl.BlockSpec(w1.shape, lambda i: (0, 0)),
            pl.BlockSpec(w2_top.shape, lambda i: (0, 0)),
            pl.BlockSpec(w2_act.shape, lambda i: (0, 0)),
            pl.BlockSpec(w3_pad.shape, lambda i: (0, 0)),
            pl.BlockSpec(biases.shape, lambda i: (0, 0)),
        ],
        out_specs=pl.BlockSpec((tile, n_pad), lambda i: (i, 0)),
        compiler_params=pltpu.CompilerParams(
            dimension_semantics=("parallel",)),
    )(state, action, w1, w2_top, w2_act, w3_pad, biases)

    return out[:B, :num_instances]


# ----------------------------------------------------------------------------
# Parameter init (mirrors the module's shapes / init bounds) + kernel packing.
# Default torch Linear init is U(-1/sqrt(fan_in), 1/sqrt(fan_in)); only the
# output *weight* is overridden to U(-0.003, 0.003) (bias keeps default).
# ----------------------------------------------------------------------------
def init_params(key, state_size, action_size, num_instances=2,
                inter_dims=(64, 256)):
    full_state = state_size * num_instances
    full_action = action_size * num_instances
    d0, d1 = inter_dims
    k2 = d0 + full_action

    N_PAD = 8   # narrow lane-padded output width (>= num_instances)
    assert num_instances <= N_PAD and d1 >= max(d0, N_PAD)

    ks = jax.random.split(key, 6)

    def u(k, shape, bound):
        return jax.random.uniform(k, shape, jnp.float32, -bound, bound)

    w1 = u(ks[0], (full_state, d0), 1.0 / full_state ** 0.5)   # input.weight.T
    b1 = u(ks[1], (d0,), 1.0 / full_state ** 0.5)              # input.bias
    w2 = u(ks[2], (k2, d1), 1.0 / k2 ** 0.5)                   # action_layer.weight.T
    b2 = u(ks[3], (d1,), 1.0 / k2 ** 0.5)                      # action_layer.bias
    w3 = u(ks[4], (d1, num_instances), 0.003)                  # output.weight.T (override)
    b3 = u(ks[5], (num_instances,), 1.0 / d1 ** 0.5)           # output.bias (default)

    # --- pack for the kernel: bf16 weights, split W2, narrow-padded W3 ------
    w2_top = w2[:d0, :]                                        # multiplies h1
    w2_act = w2[d0:, :]                                        # multiplies action
    w3_pad = jnp.zeros((d1, N_PAD), jnp.float32).at[:, :num_instances].set(w3)

    biases = jnp.zeros((3, d1), jnp.float32)
    biases = biases.at[0, :d0].set(b1)
    biases = biases.at[1, :d1].set(b2)
    biases = biases.at[2, :num_instances].set(b3)

    kernel_params = (w1.astype(jnp.bfloat16),
                     w2_top.astype(jnp.bfloat16),
                     w2_act.astype(jnp.bfloat16),
                     w3_pad.astype(jnp.bfloat16),
                     biases)
    logical_params = (w1, b1, w2, b2, w3, b3)
    return kernel_params, logical_params


# ----------------------------------------------------------------------------
# References.
# ----------------------------------------------------------------------------
def module_reference(state, action, logical_params):
    """Pure-f32 JAX replica of the PyTorch forward (explicit concat)."""
    w1, b1, w2, b2, w3, b3 = logical_params
    hp = jax.lax.Precision.HIGHEST
    h1 = jnp.maximum(jnp.dot(state, w1, precision=hp) + b1, 0.0)
    x = jnp.concatenate([h1, action], axis=1)
    h2 = jnp.maximum(jnp.dot(x, w2, precision=hp) + b2, 0.0)
    return jnp.dot(h2, w3, precision=hp) + b3


def reference_forward_bf16(state, action, kernel_params, num_instances):
    """Same math as the kernel (bf16 operands, f32 accumulate) in plain JAX."""
    w1, w2_top, w2_act, w3_pad, biases = kernel_params
    f32 = jnp.float32
    hp = jax.lax.Precision.HIGHEST
    d0 = w1.shape[1]
    n_pad = w3_pad.shape[1]

    def bf(x):
        return x.astype(jnp.bfloat16).astype(f32)

    h1 = jnp.maximum(
        jnp.dot(bf(state), w1.astype(f32), precision=hp) + biases[0:1, 0:d0],
        0.0)
    h2 = (jnp.dot(bf(h1), w2_top.astype(f32), precision=hp)
          + jnp.dot(bf(action), w2_act.astype(f32), precision=hp))
    h2 = jnp.maximum(h2 + biases[1:2, :], 0.0)
    out = jnp.dot(bf(h2), w3_pad.astype(f32), precision=hp) \
        + biases[2:3, 0:n_pad]
    return out[:, :num_instances]


if __name__ == "__main__":
    # Tennis env: state_size=24, action_size=2, num_instances=2,
    # default inter_dims=[64, 256].  Batch sized like a replay-buffer
    # minibatch so the kernel is not pure overhead.
    batch = 512
    state_size, action_size, num_instances = 24, 2, 2
    full_state = state_size * num_instances      # 48
    full_action = action_size * num_instances    # 4

    key = jax.random.PRNGKey(0)
    k_state, k_action, k_params = jax.random.split(key, 3)

    state = jax.random.normal(k_state, (batch, full_state), jnp.float32)
    action = jax.random.normal(k_action, (batch, full_action), jnp.float32)
    kparams, lparams = init_params(k_params, state_size, action_size,
                                   num_instances)

    # One jit over the whole wrapper: tile selection / pad / kernel / slice
    # dispatch as a single fused program.
    forward = jax.jit(joint_critic_forward,
                      static_argnames=("num_instances", "max_tile"))
    out = forward(state, action, kparams, num_instances=num_instances)
    out = jax.block_until_ready(out)
    assert out.shape == (batch, num_instances)

    # Tight check vs. a bf16-consistent reference (same rounding, plain JAX).
    ref_bf16 = reference_forward_bf16(state, action, kparams, num_instances)
    assert jnp.allclose(out, ref_bf16, atol=1e-3, rtol=1e-3), \
        "mismatch vs bf16-consistent reference"

    # Loose check vs. the pure-f32 module math (bf16 weight rounding only).
    ref_f32 = module_reference(state, action, lparams)
    assert jnp.allclose(out, ref_f32, atol=5e-3, rtol=5e-2), \
        "mismatch vs f32 module reference"

    print("KERNEL_OK")
</pallas_src>

<mosaic_0001>
module attributes {stable_mosaic.version = 11 : i64} {
  func.func @joint_critic_kernel(%arg0: i32, %arg1: memref<256x48xf32, #tpu.memory_space<vmem>>, %arg2: memref<256x4xf32, #tpu.memory_space<vmem>>, %arg3: memref<48x64xbf16, #tpu.memory_space<vmem>>, %arg4: memref<64x256xbf16, #tpu.memory_space<vmem>>, %arg5: memref<4x256xbf16, #tpu.memory_space<vmem>>, %arg6: memref<256x8xbf16, #tpu.memory_space<vmem>>, %arg7: memref<3x256xf32, #tpu.memory_space<vmem>>, %arg8: memref<256x8xf32, #tpu.memory_space<vmem>>) attributes {dimension_semantics = [#tpu.dimension_semantics<parallel>], iteration_bounds = array<i64: 2>, scalar_prefetch = 0 : i64, scratch_operands = 0 : i64, tpu.core_type = #tpu.core_type<tc>, window_params = [{transform_indices = @transform_0, window_bounds = array<i64: 256, 48>}, {transform_indices = @transform_1, window_bounds = array<i64: 256, 4>}, {pipeline_mode = #tpu.pipeline_mode<synchronous>, transform_indices = @transform_2, window_bounds = array<i64: 48, 64>}, {pipeline_mode = #tpu.pipeline_mode<synchronous>, transform_indices = @transform_3, window_bounds = array<i64: 64, 256>}, {pipeline_mode = #tpu.pipeline_mode<synchronous>, transform_indices = @transform_4, window_bounds = array<i64: 4, 256>}, {pipeline_mode = #tpu.pipeline_mode<synchronous>, transform_indices = @transform_5, window_bounds = array<i64: 256, 8>}, {pipeline_mode = #tpu.pipeline_mode<synchronous>, transform_indices = @transform_6, window_bounds = array<i64: 3, 256>}, {transform_indices = @transform_7, window_bounds = array<i64: 256, 8>}]} {
    %c0 = arith.constant 0 : index
    %c0_0 = arith.constant 0 : index
    %0 = vector.load %arg1[%c0, %c0_0] : memref<256x48xf32, #tpu.memory_space<vmem>>, vector<256x48xf32>
    %1 = arith.truncf %0 : vector<256x48xf32> to vector<256x48xbf16>
    %c0_1 = arith.constant 0 : index
    %c0_2 = arith.constant 0 : index
    %2 = vector.load %arg3[%c0_1, %c0_2] : memref<48x64xbf16, #tpu.memory_space<vmem>>, vector<48x64xbf16>
    %cst = arith.constant dense<0.000000e+00> : vector<256x64xf32>
    %3 = tpu.matmul %1, %2, %cst {dimension_numbers = #tpu.dot_dimension_numbers<[1], [0], [0], [1], [0, 0, 1, 1], [], []>} : vector<256x48xbf16>, vector<48x64xbf16>, vector<256x64xf32> -> vector<256x64xf32>
    %c0_3 = arith.constant 0 : index
    %c0_4 = arith.constant 0 : index
    %4 = vector.load %arg7[%c0_3, %c0_4] : memref<3x256xf32, #tpu.memory_space<vmem>>, vector<1x64xf32>
    %5 = vector.broadcast %4 : vector<1x64xf32> to vector<256x64xf32>
    %6 = arith.addf %3, %5 : vector<256x64xf32>
    %cst_5 = arith.constant 0.000000e+00 : f32
    %7 = vector.broadcast %cst_5 : f32 to vector<256x64xf32>
    %8 = arith.maximumf %6, %7 : vector<256x64xf32>
    %c0_6 = arith.constant 0 : index
    %c0_7 = arith.constant 0 : index
    %9 = vector.load %arg2[%c0_6, %c0_7] : memref<256x4xf32, #tpu.memory_space<vmem>>, vector<256x4xf32>
    %10 = arith.truncf %9 : vector<256x4xf32> to vector<256x4xbf16>
    %11 = arith.truncf %8 : vector<256x64xf32> to vector<256x64xbf16>
    %c0_8 = arith.constant 0 : index
    %c0_9 = arith.constant 0 : index
    %12 = vector.load %arg4[%c0_8, %c0_9] : memref<64x256xbf16, #tpu.memory_space<vmem>>, vector<64x256xbf16>
    %cst_10 = arith.constant dense<0.000000e+00> : vector<256x256xf32>
    %13 = tpu.matmul %11, %12, %cst_10 {dimension_numbers = #tpu.dot_dimension_numbers<[1], [0], [0], [1], [0, 0, 1, 1], [], []>} : vector<256x64xbf16>, vector<64x256xbf16>, vector<256x256xf32> -> vector<256x256xf32>
    %c0_11 = arith.constant 0 : index
    %c0_12 = arith.constant 0 : index
    %14 = vector.load %arg5[%c0_11, %c0_12] : memref<4x256xbf16, #tpu.memory_space<vmem>>, vector<4x256xbf16>
    %cst_13 = arith.constant dense<0.000000e+00> : vector<256x256xf32>
    %15 = tpu.matmul %10, %14, %cst_13 {dimension_numbers = #tpu.dot_dimension_numbers<[1], [0], [0], [1], [0, 0, 1, 1], [], []>} : vector<256x4xbf16>, vector<4x256xbf16>, vector<256x256xf32> -> vector<256x256xf32>
    %16 = arith.addf %13, %15 : vector<256x256xf32>
    %c1 = arith.constant 1 : index
    %c0_14 = arith.constant 0 : index
    %17 = vector.load %arg7[%c1, %c0_14] : memref<3x256xf32, #tpu.memory_space<vmem>>, vector<1x256xf32>
    %18 = vector.broadcast %17 : vector<1x256xf32> to vector<256x256xf32>
    %19 = arith.addf %16, %18 : vector<256x256xf32>
    %cst_15 = arith.constant 0.000000e+00 : f32
    %20 = vector.broadcast %cst_15 : f32 to vector<256x256xf32>
    %21 = arith.maximumf %19, %20 : vector<256x256xf32>
    %22 = arith.truncf %21 : vector<256x256xf32> to vector<256x256xbf16>
    %c0_16 = arith.constant 0 : index
    %c0_17 = arith.constant 0 : index
    %23 = vector.load %arg6[%c0_16, %c0_17] : memref<256x8xbf16, #tpu.memory_space<vmem>>, vector<256x8xbf16>
    %cst_18 = arith.constant dense<0.000000e+00> : vector<256x8xf32>
    %24 = tpu.matmul %22, %23, %cst_18 {dimension_numbers = #tpu.dot_dimension_numbers<[1], [0], [0], [1], [0, 0, 1, 1], [], []>} : vector<256x256xbf16>, vector<256x8xbf16>, vector<256x8xf32> -> vector<256x8xf32>
    %c2 = arith.constant 2 : index
    %c0_19 = arith.constant 0 : index
    %25 = vector.load %arg7[%c2, %c0_19] : memref<3x256xf32, #tpu.memory_space<vmem>>, vector<1x8xf32>
    %26 = vector.broadcast %25 : vector<1x8xf32> to vector<256x8xf32>
    %27 = arith.addf %24, %26 : vector<256x8xf32>
    %c0_20 = arith.constant 0 : index
    %c0_21 = arith.constant 0 : index
    %28 = vector.load %arg8[%c0_20, %c0_21] : memref<256x8xf32, #tpu.memory_space<vmem>>, vector<256x8xf32>
    tpu.vector_store %arg8[%c0_20, %c0_21], %27 {strides = array<i32>} : memref<256x8xf32, #tpu.memory_space<vmem>>, vector<256x8xf32>,
    return
  }
  func.func @transform_0(%arg0: i32) -> (i32, i32) {
    %c0_i32 = arith.constant 0 : i32
    %c0_i32_0 = arith.constant 0 : i32
    return %arg0, %c0_i32 : i32, i32
  }
  func.func @transform_1(%arg0: i32) -> (i32, i32) {
    %c0_i32 = arith.constant 0 : i32
    %c0_i32_0 = arith.constant 0 : i32
    return %arg0, %c0_i32 : i32, i32
  }
  func.func @transform_2(%arg0: i32) -> (i32, i32) {
    %c0_i32 = arith.constant 0 : i32
    %c0_i32_0 = arith.constant 0 : i32
    %c0_i32_1 = arith.constant 0 : i32
    return %c0_i32, %c0_i32_0 : i32, i32
  }
  func.func @transform_3(%arg0: i32) -> (i32, i32) {
    %c0_i32 = arith.constant 0 : i32
    %c0_i32_0 = arith.constant 0 : i32
    %c0_i32_1 = arith.constant 0 : i32
    return %c0_i32, %c0_i32_0 : i32, i32
  }
  func.func @transform_4(%arg0: i32) -> (i32, i32) {
    %c0_i32 = arith.constant 0 : i32
    %c0_i32_0 = arith.constant 0 : i32
    %c0_i32_1 = arith.constant 0 : i32
    return %c0_i32, %c0_i32_0 : i32, i32
  }
  func.func @transform_5(%arg0: i32) -> (i32, i32) {
    %c0_i32 = arith.constant 0 : i32
    %c0_i32_0 = arith.constant 0 : i32
    %c0_i32_1 = arith.constant 0 : i32
    return %c0_i32, %c0_i32_0 : i32, i32
  }
  func.func @transform_6(%arg0: i32) -> (i32, i32) {
    %c0_i32 = arith.constant 0 : i32
    %c0_i32_0 = arith.constant 0 : i32
    %c0_i32_1 = arith.constant 0 : i32
    return %c0_i32, %c0_i32_0 : i32, i32
  }
  func.func @transform_7(%arg0: i32) -> (i32, i32) {
    %c0_i32 = arith.constant 0 : i32
    %c0_i32_0 = arith.constant 0 : i32
    return %arg0, %c0_i32 : i32, i32
  }
}

</mosaic_0001>

<llo_original>
// kernel: joint_critic_forward.1
$region0: #{joint_critic_forward.1}
  #allocation0 [shape = 'u32[]', space=smem, size = 0x4, offset = 0x4, fixed_abs, tag = 'smem constant byte address 0x4 - core index']
  #allocation1 [shape = 'u32[72,128]{1,0:T(1,128)}', space=vmem, size = 0x9000, scoped, tag = 'internal scratch']
  %s0 = inlined_call_operand.vmem [shape: f32[512,48], index: 0, kind: input, shape index: {}]
  %s1 = inlined_call_operand.vmem [shape: f32[512,4], index: 1, kind: input, shape index: {}]
  %s2 = inlined_call_operand.vmem [shape: bf16[48,64], index: 2, kind: input, shape index: {}]
  %s3 = inlined_call_operand.vmem [shape: bf16[64,256], index: 3, kind: input, shape index: {}]
  %s4 = inlined_call_operand.vmem [shape: bf16[4,256], index: 4, kind: input, shape index: {}]
  %s5 = inlined_call_operand.vmem [shape: bf16[256,8], index: 5, kind: input, shape index: {}]
  %s6 = inlined_call_operand.vmem [shape: f32[3,256], index: 6, kind: input, shape index: {}]
  %s7 = inlined_call_operand.vmem [shape: f32[512,8], index: 7, kind: output, shape index: {}]
  %s8 = sld [smem:[#allocation0]]
  $region61: #{joint_critic_forward.1} parent=0
    _
  %s10 = ssub.s32 1, %s8
  %s11 = scalar_select 0, %s10, %s8
  loop: start=0, step=1, limit=4
  $region2: #{joint_critic_forward.1} parent=0 // loop_pre_header
    _
  $region3: #{joint_critic_forward.1} parent=0 // loop_header
    %s13 = sphi 0, %s17
    %p14 = scmp.ge.s32.totalorder %s13, 4
    %s23 = sphi 0, %s25
    %s26 = sphi 0, %s23
    %s27 = sphi 0, %s26
    %s43 = sphi 0, %s27
    %s49 = sphi 0, %s51
    %s52 = sphi 0, %s49
    %s53 = sphi 0, %s52
    %s69 = sphi 0, %s53
    %s73 = sphi 0, %s73
    %s75 = sphi 0, %s73
    %s76 = sphi 0, %s75
    %s90 = sphi 0, %s76
    %s94 = sphi 0, %s94
    %s96 = sphi 0, %s94
    %s97 = sphi 0, %s96
    %s111 = sphi 0, %s97
    %s115 = sphi 0, %s115
    %s117 = sphi 0, %s115
    %s118 = sphi 0, %s117
    %s132 = sphi 0, %s118
    %s136 = sphi 0, %s136
    %s138 = sphi 0, %s136
    %s139 = sphi 0, %s138
    %s153 = sphi 0, %s139
    %s157 = sphi 0, %s157
    %s159 = sphi 0, %s157
    %s160 = sphi 0, %s159
    %s174 = sphi 0, %s160
    %s180 = sphi 0, %s182
    %s183 = sphi 0, %s180
    %s184 = sphi 0, %s183
    %s200 = sphi 0, %s184
  $region4: #{joint_critic_forward.1} parent=0 // loop_header_branch
    %16 = sbr.rel (%p14) target = $region8
  $region5: #{joint_critic_forward.1} parent=0 // loop_body
    %s18 = ssub.s32 %s13, 1
    %s19 = ssub.s32 %s13, 2
    %s20 = sadd.s32 %s13, 1
    %s21 = ssub.s32 %s13, %s20
    %p22 = scmp.eq.s32.totalorder %s21, 0
    %s24 = sadd.s32 %s23, 1
    %s25 = scalar_select %p22, %s23, %s24
    %p28 = pneg %p22
    %p29 = scmp.eq.s32.totalorder %s13, 1
    %p30 = por %p28, %p29
    %p31 = scmp.ne.s32.totalorder %s23, %s26
    %p32 = scmp.eq.s32.totalorder %s13, 0
    %p33 = por %p31, %p32
    %p34 = scmp.ne.s32.totalorder %s23, %s26
    %p35 = scmp.eq.s32.totalorder %s18, 1
    %p36 = por %p34, %p35
    %p37 = scmp.ne.s32.totalorder %s26, %s27
    %p38 = scmp.eq.s32.totalorder %s18, 0
    %p39 = por %p37, %p38
    %p40 = scmp.ne.s32.totalorder %s26, %s27
    %p41 = scmp.eq.s32.totalorder %s19, 1
    %p42 = por %p40, %p41
    %p44 = scmp.ne.s32.totalorder %s27, %s43
    %p45 = scmp.eq.s32.totalorder %s19, 0
    %p46 = por %p44, %p45
    %s47 = ssub.s32 %s13, %s20
    %p48 = scmp.eq.s32.totalorder %s47, 0
    %s50 = sadd.s32 %s49, 1
    %s51 = scalar_select %p48, %s49, %s50
    %p54 = pneg %p48
    %p55 = scmp.eq.s32.totalorder %s13, 1
    %p56 = por %p54, %p55
    %p57 = scmp.ne.s32.totalorder %s49, %s52
    %p58 = scmp.eq.s32.totalorder %s13, 0
    %p59 = por %p57, %p58
    %p60 = scmp.ne.s32.totalorder %s49, %s52
    %p61 = scmp.eq.s32.totalorder %s18, 1
    %p62 = por %p60, %p61
    %p63 = scmp.ne.s32.totalorder %s52, %s53
    %p64 = scmp.eq.s32.totalorder %s18, 0
    %p65 = por %p63, %p64
    %p66 = scmp.ne.s32.totalorder %s52, %s53
    %p67 = scmp.eq.s32.totalorder %s19, 1
    %p68 = por %p66, %p67
    %p70 = scmp.ne.s32.totalorder %s53, %s69
    %p71 = scmp.eq.s32.totalorder %s19, 0
    %p72 = por %p70, %p71
    %s74 = sadd.s32 %s73, 1
    %p77 = scmp.eq.s32.totalorder %s13, 1
    %p78 = scmp.ne.s32.totalorder %s73, %s75
    %p79 = scmp.eq.s32.totalorder %s13, 0
    %p80 = por %p78, %p79
    %p81 = scmp.ne.s32.totalorder %s73, %s75
    %p82 = scmp.eq.s32.totalorder %s18, 1
    %p83 = por %p81, %p82
    %p84 = scmp.ne.s32.totalorder %s75, %s76
    %p85 = scmp.eq.s32.totalorder %s18, 0
    %p86 = por %p84, %p85
    %p87 = scmp.ne.s32.totalorder %s75, %s76
    %p88 = scmp.eq.s32.totalorder %s19, 1
    %p89 = por %p87, %p88
    %p91 = scmp.ne.s32.totalorder %s76, %s90
    %p92 = scmp.eq.s32.totalorder %s19, 0
    %p93 = por %p91, %p92
    %s95 = sadd.s32 %s94, 1
    %p98 = scmp.eq.s32.totalorder %s13, 1
    %p99 = scmp.ne.s32.totalorder %s94, %s96
    %p100 = scmp.eq.s32.totalorder %s13, 0
    %p101 = por %p99, %p100
    %p102 = scmp.ne.s32.totalorder %s94, %s96
    %p103 = scmp.eq.s32.totalorder %s18, 1
    %p104 = por %p102, %p103
    %p105 = scmp.ne.s32.totalorder %s96, %s97
    %p106 = scmp.eq.s32.totalorder %s18, 0
    %p107 = por %p105, %p106
    %p108 = scmp.ne.s32.totalorder %s96, %s97
    %p109 = scmp.eq.s32.totalorder %s19, 1
    %p110 = por %p108, %p109
    %p112 = scmp.ne.s32.totalorder %s97, %s111
    %p113 = scmp.eq.s32.totalorder %s19, 0
    %p114 = por %p112, %p113
    %s116 = sadd.s32 %s115, 1
    %p119 = scmp.eq.s32.totalorder %s13, 1
    %p120 = scmp.ne.s32.totalorder %s115, %s117
    %p121 = scmp.eq.s32.totalorder %s13, 0
    %p122 = por %p120, %p121
    %p123 = scmp.ne.s32.totalorder %s115, %s117
    %p124 = scmp.eq.s32.totalorder %s18, 1
    %p125 = por %p123, %p124
    %p126 = scmp.ne.s32.totalorder %s117, %s118
    %p127 = scmp.eq.s32.totalorder %s18, 0
    %p128 = por %p126, %p127
    %p129 = scmp.ne.s32.totalorder %s117, %s118
    %p130 = scmp.eq.s32.totalorder %s19, 1
    %p131 = por %p129, %p130
    %p133 = scmp.ne.s32.totalorder %s118, %s132
    %p134 = scmp.eq.s32.totalorder %s19, 0
    %p135 = por %p133, %p134
    %s137 = sadd.s32 %s136, 1
    %p140 = scmp.eq.s32.totalorder %s13, 1
    %p141 = scmp.ne.s32.totalorder %s136, %s138
    %p142 = scmp.eq.s32.totalorder %s13, 0
    %p143 = por %p141, %p142
    %p144 = scmp.ne.s32.totalorder %s136, %s138
    %p145 = scmp.eq.s32.totalorder %s18, 1
    %p146 = por %p144, %p145
    %p147 = scmp.ne.s32.totalorder %s138, %s139
    %p148 = scmp.eq.s32.totalorder %s18, 0
    %p149 = por %p147, %p148
    %p150 = scmp.ne.s32.totalorder %s138, %s139
    %p151 = scmp.eq.s32.totalorder %s19, 1
    %p152 = por %p150, %p151
    %p154 = scmp.ne.s32.totalorder %s139, %s153
    %p155 = scmp.eq.s32.totalorder %s19, 0
    %p156 = por %p154, %p155
    %s158 = sadd.s32 %s157, 1
    %p161 = scmp.eq.s32.totalorder %s13, 1
    %p162 = scmp.ne.s32.totalorder %s157, %s159
    %p163 = scmp.eq.s32.totalorder %s13, 0
    %p164 = por %p162, %p163
    %p165 = scmp.ne.s32.totalorder %s157, %s159
    %p166 = scmp.eq.s32.totalorder %s18, 1
    %p167 = por %p165, %p166
    %p168 = scmp.ne.s32.totalorder %s159, %s160
    %p169 = scmp.eq.s32.totalorder %s18, 0
    %p170 = por %p168, %p169
    %p171 = scmp.ne.s32.totalorder %s159, %s160
    %p172 = scmp.eq.s32.totalorder %s19, 1
    %p173 = por %p171, %p172
    %p175 = scmp.ne.s32.totalorder %s160, %s174
    %p176 = scmp.eq.s32.totalorder %s19, 0
    %p177 = por %p175, %p176
    %s178 = ssub.s32 %s13, %s20
    %p179 = scmp.eq.s32.totalorder %s178, 0
    %s181 = sadd.s32 %s180, 1
    %s182 = scalar_select %p179, %s180, %s181
    %p185 = pneg %p179
    %p186 = scmp.eq.s32.totalorder %s13, 1
    %p187 = por %p185, %p186
    %p188 = scmp.ne.s32.totalorder %s180, %s183
    %p189 = scmp.eq.s32.totalorder %s13, 0
    %p190 = por %p188, %p189
    %p191 = scmp.ne.s32.totalorder %s180, %s183
    %p192 = scmp.eq.s32.totalorder %s18, 1
    %p193 = por %p191, %p192
    %p194 = scmp.ne.s32.totalorder %s183, %s184
    %p195 = scmp.eq.s32.totalorder %s18, 0
    %p196 = por %p194, %p195
    %p197 = scmp.ne.s32.totalorder %s183, %s184
    %p198 = scmp.eq.s32.totalorder %s19, 1
    %p199 = por %p197, %p198
    %p201 = scmp.ne.s32.totalorder %s184, %s200
    %p202 = scmp.eq.s32.totalorder %s19, 0
    %p203 = por %p201, %p202
    %p204 = scmp.le.s32.totalorder 1, %s13
    %p205 = scmp.lt.s32.totalorder %s13, 3
    %p206 = pnand %p204, %p205
    %p207 = pneg %p206
    // Predicated region
    $region9: #{joint_critic_forward.1} parent=5 // pred_check
      _
    $region10: #{joint_critic_forward.1} parent=5 // pred_check_branch
      %209 = sbr.rel (%p206) target = $region12
    $region11: #{joint_critic_forward.1} parent=5 // pred_region
      %s210 = ssub.s32 %s13, 1
      // Predicated region
      $region13: #{joint_critic_forward.1} parent=11 // pred_check
        %p211 = pneg %p86
      $region14: #{joint_critic_forward.1} parent=11 // pred_check_branch
        %213 = sbr.rel (%p211) target = $region16
      $region15: #{joint_critic_forward.1} parent=11 // pred_region
        _
      $region16: #{joint_critic_forward.1} parent=11 // pred_fallthru
        _
      // Predicated region
      $region17: #{joint_critic_forward.1} parent=11 // pred_check
        %p214 = pneg %p107
      $region18: #{joint_critic_forward.1} parent=11 // pred_check_branch
        %216 = sbr.rel (%p214) target = $region20
      $region19: #{joint_critic_forward.1} parent=11 // pred_region
        _
      $region20: #{joint_critic_forward.1} parent=11 // pred_fallthru
        _
      // Predicated region
      $region21: #{joint_critic_forward.1} parent=11 // pred_check
        %p217 = pneg %p128
      $region22: #{joint_critic_forward.1} parent=11 // pred_check_branch
        %219 = sbr.rel (%p217) target = $region24
      $region23: #{joint_critic_forward.1} parent=11 // pred_region
        _
      $region24: #{joint_critic_forward.1} parent=11 // pred_fallthru
        _
      // Predicated region
      $region25: #{joint_critic_forward.1} parent=11 // pred_check
        %p220 = pneg %p149
      $region26: #{joint_critic_forward.1} parent=11 // pred_check_branch
        %222 = sbr.rel (%p220) target = $region28
      $region27: #{joint_critic_forward.1} parent=11 // pred_region
        _
      $region28: #{joint_critic_forward.1} parent=11 // pred_fallthru
        _
      // Predicated region
      $region29: #{joint_critic_forward.1} parent=11 // pred_check
        %p223 = pneg %p170
      $region30: #{joint_critic_forward.1} parent=11 // pred_check_branch
        %225 = sbr.rel (%p223) target = $region32
      $region31: #{joint_critic_forward.1} parent=11 // pred_region
        _
      $region32: #{joint_critic_forward.1} parent=11 // pred_fallthru
        _
    $region12: #{joint_critic_forward.1} parent=5 // pred_fallthru
      _
    %p226 = scmp.lt.s32.totalorder %s13, 2
    // Predicated region
    $region33: #{joint_critic_forward.1} parent=5 // pred_check
      %p227 = pneg %p226
    $region34: #{joint_critic_forward.1} parent=5 // pred_check_branch
      %229 = sbr.rel (%p227) target = $region36
    $region35: #{joint_critic_forward.1} parent=5 // pred_region
      // Predicated region
      $region37: #{joint_critic_forward.1} parent=35 // pred_check
        %p230 = pneg %p33
      $region38: #{joint_critic_forward.1} parent=35 // pred_check_branch
        %232 = sbr.rel (%p230) target = $region40
      $region39: #{joint_critic_forward.1} parent=35 // pred_region
        %s233 = smul.u32 32, %s13
        %p234 = scmp.lt.s32.totalorder %s233, 63
        %s235 = scalar_select %p234, %s233, 63
        %s236 = smul.addr %s235, 8
        %s237 = scalar_lea.vmem %s0, %s236
        %s238 = smul.u32 32, %s13
      $region40: #{joint_critic_forward.1} parent=35 // pred_fallthru
        _
      // Predicated region
      $region41: #{joint_critic_forward.1} parent=35 // pred_check
        %p239 = pneg %p59
      $region42: #{joint_critic_forward.1} parent=35 // pred_check_branch
        %241 = sbr.rel (%p239) target = $region44
      $region43: #{joint_critic_forward.1} parent=35 // pred_region
        %s242 = smul.u32 32, %s13
        %p243 = scmp.lt.s32.totalorder %s242, 63
        %s244 = scalar_select %p243, %s242, 63
        %s245 = smul.addr %s244, 8
        %s246 = scalar_lea.vmem %s1, %s245
        %s247 = smul.u32 32, %s13
      $region44: #{joint_critic_forward.1} parent=35 // pred_fallthru
        _
    $region36: #{joint_critic_forward.1} parent=5 // pred_fallthru
      _
    %p248 = scmp.le.s32.totalorder 1, %s13
    %p249 = scmp.lt.s32.totalorder %s13, 3
    %p250 = pnand %p248, %p249
    %p251 = pneg %p250
    // Predicated region
    $region45: #{joint_critic_forward.1} parent=5 // pred_check
      _
    $region46: #{joint_critic_forward.1} parent=5 // pred_check_branch
      %253 = sbr.rel (%p250) target = $region48
    $region47: #{joint_critic_forward.1} parent=5 // pred_region
      %s254 = ssub.s32 %s13, 1
      %s255 = smul.u32 32, %s18
      %p256 = scmp.lt.s32.totalorder %s255, 63
      %s257 = scalar_select %p256, %s255, 63
      %s258 = smul.addr %s257, 8
      %s259 = scalar_lea.vmem %s0, %s258
      %p260 = pneg %p39
      %p261 = pneg %p36
      %s262 = smul.u32 32, %s18
      %p263 = scmp.lt.s32.totalorder %s262, 63
      %s264 = scalar_select %p263, %s262, 63
      %s265 = smul.addr %s264, 8
      %s266 = scalar_lea.vmem %s1, %s265
      %p267 = pneg %p65
      %p268 = pneg %p62
      %p269 = pneg %p86
      %p270 = pneg %p83
      %p271 = pneg %p107
      %p272 = pneg %p104
      %p273 = pneg %p128
      %p274 = pneg %p125
      %p275 = pneg %p149
      %p276 = pneg %p146
      %p277 = pneg %p170
      %p278 = pneg %p167
      %p279 = pneg %p196
      %p280 = pneg %p193
      %s281 = smul.u32 32, %s18
      %p282 = scmp.lt.s32.totalorder %s281, 63
      %s283 = scalar_select %p282, %s281, 63
      %s284 = smul.addr %s283, 8
      %s285 = scalar_lea.vmem %s7, %s284
      %s286 = smul.u32 32, %s18
      %p287 = scmp.lt.s32.totalorder %s286, 63
      %s288 = scalar_select %p287, %s286, 63
      %s289 = smul.addr %s288, 8
      %s290 = scalar_lea.vmem %s0, %s289
      %s291 = smul.u32 32, %s18
      %s292 = smul.u32 32, %s18
      %p293 = scmp.lt.s32.totalorder %s292, 63
      %s294 = scalar_select %p293, %s292, 63
      %s295 = smul.addr %s294, 8
      %s296 = scalar_lea.vmem %s1, %s295
      %s297 = smul.u32 32, %s18
      %s298 = smul.u32 32, %s18
      %p299 = scmp.lt.s32.totalorder %s298, 63
      %s300 = scalar_select %p299, %s298, 63
      %s301 = smul.addr %s300, 8
      %s302 = scalar_lea.vmem %s7, %s301
      %s303 = smul.u32 32, %s18
      %v305 = vld [vmem:[%s290] sm:$0xff]
      %v306 = vld [vmem:[%s290 + $0x8] sm:$0xff]
      %v307 = vld [vmem:[%s290 + $0x10] sm:$0xff]
      %v308 = vld [vmem:[%s290 + $0x18] sm:$0xff]
      %v309 = vld [vmem:[%s290 + $0x20] sm:$0xff]
      %v310 = vld [vmem:[%s290 + $0x28] sm:$0xff]
      %v311 = vld [vmem:[%s290 + $0x30] sm:$0xff]
      %v312 = vld [vmem:[%s290 + $0x38] sm:$0xff]
      %v313 = vld [vmem:[%s290 + $0x40] sm:$0xff]
      %v314 = vld [vmem:[%s290 + $0x48] sm:$0xff]
      %v315 = vld [vmem:[%s290 + $0x50] sm:$0xff]
      %v316 = vld [vmem:[%s290 + $0x58] sm:$0xff]
      %v317 = vld [vmem:[%s290 + $0x60] sm:$0xff]
      %v318 = vld [vmem:[%s290 + $0x68] sm:$0xff]
      %v319 = vld [vmem:[%s290 + $0x70] sm:$0xff]
      %v320 = vld [vmem:[%s290 + $0x78] sm:$0xff]
      %v321 = vld [vmem:[%s290 + $0x80] sm:$0xff]
      %v322 = vld [vmem:[%s290 + $0x88] sm:$0xff]
      %v323 = vld [vmem:[%s290 + $0x90] sm:$0xff]
      %v324 = vld [vmem:[%s290 + $0x98] sm:$0xff]
      %v325 = vld [vmem:[%s290 + $0xa0] sm:$0xff]
      %v326 = vld [vmem:[%s290 + $0xa8] sm:$0xff]
      %v327 = vld [vmem:[%s290 + $0xb0] sm:$0xff]
      %v328 = vld [vmem:[%s290 + $0xb8] sm:$0xff]
      %v329 = vld [vmem:[%s290 + $0xc0] sm:$0xff]
      %v330 = vld [vmem:[%s290 + $0xc8] sm:$0xff]
      %v331 = vld [vmem:[%s290 + $0xd0] sm:$0xff]
      %v332 = vld [vmem:[%s290 + $0xd8] sm:$0xff]
      %v333 = vld [vmem:[%s290 + $0xe0] sm:$0xff]
      %v334 = vld [vmem:[%s290 + $0xe8] sm:$0xff]
      %v335 = vld [vmem:[%s290 + $0xf0] sm:$0xff]
      %v336 = vld [vmem:[%s290 + $0xf8] sm:$0xff]
      %v337 = vpack.c.bf16 %v306, %v305
      %v338 = vpack.c.bf16 %v308, %v307
      %v339 = vpack.c.bf16 %v310, %v309
      %v340 = vpack.c.bf16 %v312, %v311
      %v341 = vpack.c.bf16 %v314, %v313
      %v342 = vpack.c.bf16 %v316, %v315
      %v343 = vpack.c.bf16 %v318, %v317
      %v344 = vpack.c.bf16 %v320, %v319
      %v345 = vpack.c.bf16 %v322, %v321
      %v346 = vpack.c.bf16 %v324, %v323
      %v347 = vpack.c.bf16 %v326, %v325
      %v348 = vpack.c.bf16 %v328, %v327
      %v349 = vpack.c.bf16 %v330, %v329
      %v350 = vpack.c.bf16 %v332, %v331
      %v351 = vpack.c.bf16 %v334, %v333
      %v352 = vpack.c.bf16 %v336, %v335
      %v353 = vld [vmem:[%s2] sm:$0xf]
      %v354 = vld [vmem:[%s2 + $0x4] sm:$0xf]
      %v355 = vld [vmem:[%s2 + $0x8] sm:$0xf]
      %v356 = vld [vmem:[%s2 + $0xc] sm:$0xf]
      %v357 = vld [vmem:[%s2 + $0x10] sm:$0xf]
      %v358 = vld [vmem:[%s2 + $0x14] sm:$0xf]
      %v359 = vld [vmem:[%s6] sm:$0x1]
      %v360 = vperm.slane %v359, 0
      %v367 = vunpack.c.l.b16 %v353
      %v368 = vunpack.c.l.b16 %v354
      %v369 = vunpack.c.l.b16 %v355
      %v370 = vunpack.c.l.b16 %v356
      %v371 = vunpack.c.l.b16 %v357
      %v372 = vunpack.c.l.b16 %v358
      %v373 = vpack.c.b16 %v368, %v367
      %v374 = vpack.c.b16 %v370, %v369
      %v375 = vpack.c.b16 %v372, %v371
      %vm379 = vcmask 392192
      %v381 = vsel %vm379, %v337, 0
      %v384 = vsel %vm379, %v338, 0
      %v387 = vsel %vm379, %v339, 0
      %v390 = vsel %vm379, %v340, 0
      %v393 = vsel %vm379, %v341, 0
      %v396 = vsel %vm379, %v342, 0
      %v399 = vsel %vm379, %v343, 0
      %v402 = vsel %vm379, %v344, 0
      %v405 = vsel %vm379, %v345, 0
      %v408 = vsel %vm379, %v346, 0
      %v411 = vsel %vm379, %v347, 0
      %v414 = vsel %vm379, %v348, 0
      %v417 = vsel %vm379, %v349, 0
      %v420 = vsel %vm379, %v350, 0
      %v423 = vsel %vm379, %v351, 0
      %v426 = vsel %vm379, %v352, 0
      %428 = vmatpush.bf16.msra.mxu0 0
      %429 = vmatpush.bf16.msra.mxu0 0
      %430 = vmatpush.bf16.msra.mxu0 0
      %431 = vmatpush.bf16.msra.mxu0 0
      %432 = vmatpush.bf16.msra.mxu0 0
      %433 = vmatpush.bf16.msra.mxu0 %v375
      %434 = vmatpush.bf16.msra.mxu0 %v374
      %435 = vmatpush.bf16.msra.mxu0 %v373
      %436 = vmatmul.bf16.gmra.mxu0 %v381
      %v437 = vpop.f32.mrf.mxu0
      %v438 = vadd.f32 %v360, %v437
      %v439 = vpop.f32.mrf.mxu0
      %v440 = vadd.f32 %v360, %v439
      %441 = vmatmul.bf16.gmra.mxu0 %v384
      %v442 = vpop.f32.mrf.mxu0
      %v443 = vadd.f32 %v360, %v442
      %v444 = vpop.f32.mrf.mxu0
      %v445 = vadd.f32 %v360, %v444
      %446 = vmatmul.bf16.gmra.mxu0 %v387
      %v447 = vpop.f32.mrf.mxu0
      %v448 = vadd.f32 %v360, %v447
      %v449 = vpop.f32.mrf.mxu0
      %v450 = vadd.f32 %v360, %v449
      %451 = vmatmul.bf16.gmra.mxu0 %v390
      %v452 = vpop.f32.mrf.mxu0
      %v453 = vadd.f32 %v360, %v452
      %v454 = vpop.f32.mrf.mxu0
      %v455 = vadd.f32 %v360, %v454
      %456 = vmatmul.bf16.gmra.mxu0 %v393
      %v457 = vpop.f32.mrf.mxu0
      %v458 = vadd.f32 %v360, %v457
      %v459 = vpop.f32.mrf.mxu0
      %v460 = vadd.f32 %v360, %v459
      %461 = vmatmul.bf16.gmra.mxu0 %v396
      %v462 = vpop.f32.mrf.mxu0
      %v463 = vadd.f32 %v360, %v462
      %v464 = vpop.f32.mrf.mxu0
      %v465 = vadd.f32 %v360, %v464
      %466 = vmatmul.bf16.gmra.mxu0 %v399
      %v467 = vpop.f32.mrf.mxu0
      %v468 = vadd.f32 %v360, %v467
      %v469 = vpop.f32.mrf.mxu0
      %v470 = vadd.f32 %v360, %v469
      %471 = vmatmul.bf16.gmra.mxu0 %v402
      %v472 = vpop.f32.mrf.mxu0
      %v473 = vadd.f32 %v360, %v472
      %v474 = vpop.f32.mrf.mxu0
      %v475 = vadd.f32 %v360, %v474
      %476 = vmatmul.bf16.gmra.mxu0 %v405
      %v477 = vpop.f32.mrf.mxu0
      %v478 = vadd.f32 %v360, %v477
      %v479 = vpop.f32.mrf.mxu0
      %v480 = vadd.f32 %v360, %v479
      %481 = vmatmul.bf16.gmra.mxu0 %v408
      %v482 = vpop.f32.mrf.mxu0
      %v483 = vadd.f32 %v360, %v482
      %v484 = vpop.f32.mrf.mxu0
      %v485 = vadd.f32 %v360, %v484
      %486 = vmatmul.bf16.gmra.mxu0 %v411
      %v487 = vpop.f32.mrf.mxu0
      %v488 = vadd.f32 %v360, %v487
      %v489 = vpop.f32.mrf.mxu0
      %v490 = vadd.f32 %v360, %v489
      %491 = vmatmul.bf16.gmra.mxu0 %v414
      %v492 = vpop.f32.mrf.mxu0
      %v493 = vadd.f32 %v360, %v492
      %v494 = vpop.f32.mrf.mxu0
      %v495 = vadd.f32 %v360, %v494
      %496 = vmatmul.bf16.gmra.mxu0 %v417
      %v497 = vpop.f32.mrf.mxu0
      %v498 = vadd.f32 %v360, %v497
      %v499 = vpop.f32.mrf.mxu0
      %v500 = vadd.f32 %v360, %v499
      %501 = vmatmul.bf16.gmra.mxu0 %v420
      %v502 = vpop.f32.mrf.mxu0
      %v503 = vadd.f32 %v360, %v502
      %v504 = vpop.f32.mrf.mxu0
      %v505 = vadd.f32 %v360, %v504
      %506 = vmatmul.bf16.gmra.mxu0 %v423
      %v507 = vpop.f32.mrf.mxu0
      %v508 = vadd.f32 %v360, %v507
      %v509 = vpop.f32.mrf.mxu0
      %v510 = vadd.f32 %v360, %v509
      %511 = vmatmul.bf16.gmra.mxu0 %v426
      %v512 = vpop.f32.mrf.mxu0
      %v513 = vadd.f32 %v360, %v512
      %v514 = vpop.f32.mrf.mxu0
      %v515 = vadd.f32 %v360, %v514
      %516 = vdwg.mxu0
      %v517 = vmax.f32 %v438, 0.0
      %v518 = vmax.f32 %v440, 0.0
      %v519 = vmax.f32 %v443, 0.0
      %v520 = vmax.f32 %v445, 0.0
      %v521 = vmax.f32 %v448, 0.0
      %v522 = vmax.f32 %v450, 0.0
      %v523 = vmax.f32 %v453, 0.0
      %v524 = vmax.f32 %v455, 0.0
      %v525 = vmax.f32 %v458, 0.0
      %v526 = vmax.f32 %v460, 0.0
      %v527 = vmax.f32 %v463, 0.0
      %v528 = vmax.f32 %v465, 0.0
      %v529 = vmax.f32 %v468, 0.0
      %v530 = vmax.f32 %v470, 0.0
      %v531 = vmax.f32 %v473, 0.0
      %v532 = vmax.f32 %v475, 0.0
      %v533 = vmax.f32 %v478, 0.0
      %v534 = vmax.f32 %v480, 0.0
      %v535 = vmax.f32 %v483, 0.0
      %v536 = vmax.f32 %v485, 0.0
      %v537 = vmax.f32 %v488, 0.0
      %v538 = vmax.f32 %v490, 0.0
      %v539 = vmax.f32 %v493, 0.0
      %v540 = vmax.f32 %v495, 0.0
      %v541 = vmax.f32 %v498, 0.0
      %v542 = vmax.f32 %v500, 0.0
      %v543 = vmax.f32 %v503, 0.0
      %v544 = vmax.f32 %v505, 0.0
      %v545 = vmax.f32 %v508, 0.0
      %v546 = vmax.f32 %v510, 0.0
      %v547 = vmax.f32 %v513, 0.0
      %v548 = vmax.f32 %v515, 0.0
      %v549 = vld [vmem:[%s296] sm:$0xff]
      %v550 = vld [vmem:[%s296 + $0x8] sm:$0xff]
      %v551 = vld [vmem:[%s296 + $0x10] sm:$0xff]
      %v552 = vld [vmem:[%s296 + $0x18] sm:$0xff]
      %v553 = vld [vmem:[%s296 + $0x20] sm:$0xff]
      %v554 = vld [vmem:[%s296 + $0x28] sm:$0xff]
      %v555 = vld [vmem:[%s296 + $0x30] sm:$0xff]
      %v556 = vld [vmem:[%s296 + $0x38] sm:$0xff]
      %v557 = vld [vmem:[%s296 + $0x40] sm:$0xff]
      %v558 = vld [vmem:[%s296 + $0x48] sm:$0xff]
      %v559 = vld [vmem:[%s296 + $0x50] sm:$0xff]
      %v560 = vld [vmem:[%s296 + $0x58] sm:$0xff]
      %v561 = vld [vmem:[%s296 + $0x60] sm:$0xff]
      %v562 = vld [vmem:[%s296 + $0x68] sm:$0xff]
      %v563 = vld [vmem:[%s296 + $0x70] sm:$0xff]
      %v564 = vld [vmem:[%s296 + $0x78] sm:$0xff]
      %v565 = vld [vmem:[%s296 + $0x80] sm:$0xff]
      %v566 = vld [vmem:[%s296 + $0x88] sm:$0xff]
      %v567 = vld [vmem:[%s296 + $0x90] sm:$0xff]
      %v568 = vld [vmem:[%s296 + $0x98] sm:$0xff]
      %v569 = vld [vmem:[%s296 + $0xa0] sm:$0xff]
      %v570 = vld [vmem:[%s296 + $0xa8] sm:$0xff]
      %v571 = vld [vmem:[%s296 + $0xb0] sm:$0xff]
      %v572 = vld [vmem:[%s296 + $0xb8] sm:$0xff]
      %v573 = vld [vmem:[%s296 + $0xc0] sm:$0xff]
      %v574 = vld [vmem:[%s296 + $0xc8] sm:$0xff]
      %v575 = vld [vmem:[%s296 + $0xd0] sm:$0xff]
      %v576 = vld [vmem:[%s296 + $0xd8] sm:$0xff]
      %v577 = vld [vmem:[%s296 + $0xe0] sm:$0xff]
      %v578 = vld [vmem:[%s296 + $0xe8] sm:$0xff]
      %v579 = vld [vmem:[%s296 + $0xf0] sm:$0xff]
      %v580 = vld [vmem:[%s296 + $0xf8] sm:$0xff]
      %v581 = vpack.c.bf16 %v550, %v549
      %v582 = vpack.c.bf16 %v552, %v551
      %v583 = vpack.c.bf16 %v554, %v553
      %v584 = vpack.c.bf16 %v556, %v555
      %v585 = vpack.c.bf16 %v558, %v557
      %v586 = vpack.c.bf16 %v560, %v559
      %v587 = vpack.c.bf16 %v562, %v561
      %v588 = vpack.c.bf16 %v564, %v563
      %v589 = vpack.c.bf16 %v566, %v565
      %v590 = vpack.c.bf16 %v568, %v567
      %v591 = vpack.c.bf16 %v570, %v569
      %v592 = vpack.c.bf16 %v572, %v571
      %v593 = vpack.c.bf16 %v574, %v573
      %v594 = vpack.c.bf16 %v576, %v575
      %v595 = vpack.c.bf16 %v578, %v577
      %v596 = vpack.c.bf16 %v580, %v579
      %v597 = vpack.c.bf16 %v518, %v517
      %v598 = vpack.c.bf16 %v520, %v519
      %v599 = vpack.c.bf16 %v522, %v521
      %v600 = vpack.c.bf16 %v524, %v523
      %v601 = vpack.c.bf16 %v526, %v525
      %v602 = vpack.c.bf16 %v528, %v527
      %v603 = vpack.c.bf16 %v530, %v529
      %v604 = vpack.c.bf16 %v532, %v531
      %v605 = vpack.c.bf16 %v534, %v533
      %v606 = vpack.c.bf16 %v536, %v535
      %v607 = vpack.c.bf16 %v538, %v537
      %v608 = vpack.c.bf16 %v540, %v539
      %v609 = vpack.c.bf16 %v542, %v541
      %v610 = vpack.c.bf16 %v544, %v543
      %v611 = vpack.c.bf16 %v546, %v545
      %v612 = vpack.c.bf16 %v548, %v547
      %v613 = vld [vmem:[%s3] sm:$0xff]
      %v614 = vld [vmem:[%s3 + $0x8] sm:$0xff]
      %v615 = vld [vmem:[%s3 + $0x10] sm:$0xff]
      %v616 = vld [vmem:[%s3 + $0x18] sm:$0xff]
      %v617 = vld [vmem:[%s3 + $0x20] sm:$0xff]
      %v618 = vld [vmem:[%s3 + $0x28] sm:$0xff]
      %v619 = vld [vmem:[%s3 + $0x30] sm:$0xff]
      %v620 = vld [vmem:[%s3 + $0x38] sm:$0xff]
      %v621 = vld [vmem:[%s4] sm:$0xf]
      %623 = vst [vmem:[#allocation1] ss:$4 sm:$0xff] %v621
      %v624 = vld.sshfl [vmem:[#allocation1] sm:$0xff pattern:$0x73625140]
      %v625 = vld.sshfl [vmem:[#allocation1 + $0x8] sm:$0xff pattern:$0x73625140]
      %vm626 = vcmask 31744
      %v628 = vsel %vm626, %v581, 0
      %v631 = vsel %vm626, %v582, 0
      %v634 = vsel %vm626, %v583, 0
      %v637 = vsel %vm626, %v584, 0
      %v640 = vsel %vm626, %v585, 0
      %v643 = vsel %vm626, %v586, 0
      %v646 = vsel %vm626, %v587, 0
      %v649 = vsel %vm626, %v588, 0
      %v652 = vsel %vm626, %v589, 0
      %v655 = vsel %vm626, %v590, 0
      %v658 = vsel %vm626, %v591, 0
      %v661 = vsel %vm626, %v592, 0
      %v664 = vsel %vm626, %v593, 0
      %v667 = vsel %vm626, %v594, 0
      %v670 = vsel %vm626, %v595, 0
      %v673 = vsel %vm626, %v596, 0
      %vm675 = vcmask 1041408
      %v676 = vsel %vm675, %v624, 0
      %v678 = vsel %vm675, %v625, 0
      %680 = vmatpush.bf16.msra.mxu0 0
      %681 = vmatpush.bf16.msra.mxu0 0
      %682 = vmatpush.bf16.msra.mxu0 0
      %683 = vmatpush.bf16.msra.mxu0 0
      %684 = vmatpush.bf16.msra.mxu0 0
      %685 = vmatpush.bf16.msra.mxu0 0
      %686 = vmatpush.bf16.msra.mxu0 0
      %687 = vmatpush.bf16.msra.mxu0 %v676
      %688 = vmatmul.bf16.gmra.mxu0 %v628
      %v689 = vpop.f32.mrf.mxu0
      %v690 = vadd.f32 0.0, %v689
      %v691 = vpop.f32.mrf.mxu0
      %v692 = vadd.f32 0.0, %v691
      %693 = vmatmul.bf16.gmra.mxu0 %v631
      %v694 = vpop.f32.mrf.mxu0
      %v695 = vadd.f32 0.0, %v694
      %v696 = vpop.f32.mrf.mxu0
      %v697 = vadd.f32 0.0, %v696
      %698 = vmatmul.bf16.gmra.mxu0 %v634
      %v699 = vpop.f32.mrf.mxu0
      %v700 = vadd.f32 0.0, %v699
      %v701 = vpop.f32.mrf.mxu0
      %v702 = vadd.f32 0.0, %v701
      %703 = vmatmul.bf16.gmra.mxu0 %v637
      %v704 = vpop.f32.mrf.mxu0
      %v705 = vadd.f32 0.0, %v704
      %v706 = vpop.f32.mrf.mxu0
      %v707 = vadd.f32 0.0, %v706
      %708 = vmatmul.bf16.gmra.mxu0 %v640
      %v709 = vpop.f32.mrf.mxu0
      %v710 = vadd.f32 0.0, %v709
      %v711 = vpop.f32.mrf.mxu0
      %v712 = vadd.f32 0.0, %v711
      %713 = vmatmul.bf16.gmra.mxu0 %v643
      %v714 = vpop.f32.mrf.mxu0
      %v715 = vadd.f32 0.0, %v714
      %v716 = vpop.f32.mrf.mxu0
      %v717 = vadd.f32 0.0, %v716
      %718 = vmatmul.bf16.gmra.mxu0 %v646
      %v719 = vpop.f32.mrf.mxu0
      %v720 = vadd.f32 0.0, %v719
      %v721 = vpop.f32.mrf.mxu0
      %v722 = vadd.f32 0.0, %v721
      %723 = vmatmul.bf16.gmra.mxu0 %v649
      %v724 = vpop.f32.mrf.mxu0
      %v725 = vadd.f32 0.0, %v724
      %v726 = vpop.f32.mrf.mxu0
      %v727 = vadd.f32 0.0, %v726
      %728 = vmatmul.bf16.gmra.mxu0 %v652
      %v729 = vpop.f32.mrf.mxu0
      %v730 = vadd.f32 0.0, %v729
      %v731 = vpop.f32.mrf.mxu0
      %v732 = vadd.f32 0.0, %v731
      %733 = vmatmul.bf16.gmra.mxu0 %v655
      %v734 = vpop.f32.mrf.mxu0
      %v735 = vadd.f32 0.0, %v734
      %v736 = vpop.f32.mrf.mxu0
      %v737 = vadd.f32 0.0, %v736
      %738 = vmatmul.bf16.gmra.mxu0 %v658
      %v739 = vpop.f32.mrf.mxu0
      %v740 = vadd.f32 0.0, %v739
      %v741 = vpop.f32.mrf.mxu0
      %v742 = vadd.f32 0.0, %v741
      %743 = vmatmul.bf16.gmra.mxu0 %v661
      %v744 = vpop.f32.mrf.mxu0
      %v745 = vadd.f32 0.0, %v744
      %v746 = vpop.f32.mrf.mxu0
      %v747 = vadd.f32 0.0, %v746
      %748 = vmatmul.bf16.gmra.mxu0 %v664
      %v749 = vpop.f32.mrf.mxu0
      %v750 = vadd.f32 0.0, %v749
      %v751 = vpop.f32.mrf.mxu0
      %v752 = vadd.f32 0.0, %v751
      %753 = vmatmul.bf16.gmra.mxu0 %v667
      %v754 = vpop.f32.mrf.mxu0
      %v755 = vadd.f32 0.0, %v754
      %v756 = vpop.f32.mrf.mxu0
      %v757 = vadd.f32 0.0, %v756
      %758 = vmatmul.bf16.gmra.mxu0 %v670
      %v759 = vpop.f32.mrf.mxu0
      %v760 = vadd.f32 0.0, %v759
      %v761 = vpop.f32.mrf.mxu0
      %v762 = vadd.f32 0.0, %v761
      %763 = vmatmul.bf16.gmra.mxu0 %v673
      %v764 = vpop.f32.mrf.mxu0
      %v765 = vadd.f32 0.0, %v764
      %v766 = vpop.f32.mrf.mxu0
      %v767 = vadd.f32 0.0, %v766
      %768 = vdwg.mxu0
      %769 = vmatpush.bf16.msra.mxu0 0
      %770 = vmatpush.bf16.msra.mxu0 0
      %771 = vmatpush.bf16.msra.mxu0 0
      %772 = vmatpush.bf16.msra.mxu0 0
      %773 = vmatpush.bf16.msra.mxu0 0
      %774 = vmatpush.bf16.msra.mxu0 0
      %775 = vmatpush.bf16.msra.mxu0 0
      %776 = vmatpush.bf16.msra.mxu0 %v678
      %777 = vmatmul.bf16.gmra.mxu0 %v628
      %v778 = vpop.f32.mrf.mxu0
      %v779 = vadd.f32 0.0, %v778
      %v780 = vpop.f32.mrf.mxu0
      %v781 = vadd.f32 0.0, %v780
      %782 = vmatmul.bf16.gmra.mxu0 %v631
      %v783 = vpop.f32.mrf.mxu0
      %v784 = vadd.f32 0.0, %v783
      %v785 = vpop.f32.mrf.mxu0
      %v786 = vadd.f32 0.0, %v785
      %787 = vmatmul.bf16.gmra.mxu0 %v634
      %v788 = vpop.f32.mrf.mxu0
      %v789 = vadd.f32 0.0, %v788
      %v790 = vpop.f32.mrf.mxu0
      %v791 = vadd.f32 0.0, %v790
      %792 = vmatmul.bf16.gmra.mxu0 %v637
      %v793 = vpop.f32.mrf.mxu0
      %v794 = vadd.f32 0.0, %v793
      %v795 = vpop.f32.mrf.mxu0
      %v796 = vadd.f32 0.0, %v795
      %797 = vmatmul.bf16.gmra.mxu0 %v640
      %v798 = vpop.f32.mrf.mxu0
      %v799 = vadd.f32 0.0, %v798
      %v800 = vpop.f32.mrf.mxu0
      %v801 = vadd.f32 0.0, %v800
      %802 = vmatmul.bf16.gmra.mxu0 %v643
      %v803 = vpop.f32.mrf.mxu0
      %v804 = vadd.f32 0.0, %v803
      %v805 = vpop.f32.mrf.mxu0
      %v806 = vadd.f32 0.0, %v805
      %807 = vmatmul.bf16.gmra.mxu0 %v646
      %v808 = vpop.f32.mrf.mxu0
      %v809 = vadd.f32 0.0, %v808
      %v810 = vpop.f32.mrf.mxu0
      %v811 = vadd.f32 0.0, %v810
      %812 = vmatmul.bf16.gmra.mxu0 %v649
      %v813 = vpop.f32.mrf.mxu0
      %v814 = vadd.f32 0.0, %v813
      %v815 = vpop.f32.mrf.mxu0
      %v816 = vadd.f32 0.0, %v815
      %817 = vmatmul.bf16.gmra.mxu0 %v652
      %v818 = vpop.f32.mrf.mxu0
      %v819 = vadd.f32 0.0, %v818
      %v820 = vpop.f32.mrf.mxu0
      %v821 = vadd.f32 0.0, %v820
      %822 = vmatmul.bf16.gmra.mxu0 %v655
      %v823 = vpop.f32.mrf.mxu0
      %v824 = vadd.f32 0.0, %v823
      %v825 = vpop.f32.mrf.mxu0
      %v826 = vadd.f32 0.0, %v825
      %827 = vmatmul.bf16.gmra.mxu0 %v658
      %v828 = vpop.f32.mrf.mxu0
      %v829 = vadd.f32 0.0, %v828
      %v830 = vpop.f32.mrf.mxu0
      %v831 = vadd.f32 0.0, %v830
      %832 = vmatmul.bf16.gmra.mxu0 %v661
      %v833 = vpop.f32.mrf.mxu0
      %v834 = vadd.f32 0.0, %v833
      %v835 = vpop.f32.mrf.mxu0
      %v836 = vadd.f32 0.0, %v835
      %837 = vmatmul.bf16.gmra.mxu0 %v664
      %v838 = vpop.f32.mrf.mxu0
      %v839 = vadd.f32 0.0, %v838
      %v840 = vpop.f32.mrf.mxu0
      %v841 = vadd.f32 0.0, %v840
      %842 = vmatmul.bf16.gmra.mxu0 %v667
      %v843 = vpop.f32.mrf.mxu0
      %v844 = vadd.f32 0.0, %v843
      %v845 = vpop.f32.mrf.mxu0
      %v846 = vadd.f32 0.0, %v845
      %847 = vmatmul.bf16.gmra.mxu0 %v670
      %v848 = vpop.f32.mrf.mxu0
      %v849 = vadd.f32 0.0, %v848
      %v850 = vpop.f32.mrf.mxu0
      %v851 = vadd.f32 0.0, %v850
      %852 = vmatmul.bf16.gmra.mxu0 %v673
      %v853 = vpop.f32.mrf.mxu0
      %v854 = vadd.f32 0.0, %v853
      %v855 = vpop.f32.mrf.mxu0
      %v856 = vadd.f32 0.0, %v855
      %857 = vdwg.mxu0
      %v866 = vunpack.c.l.b16 %v613
      %v867 = vunpack.c.h.b16 %v613
      %v868 = vunpack.c.l.b16 %v614
      %v869 = vunpack.c.h.b16 %v614
      %v870 = vunpack.c.l.b16 %v615
      %v871 = vunpack.c.h.b16 %v615
      %v872 = vunpack.c.l.b16 %v616
      %v873 = vunpack.c.h.b16 %v616
      %v874 = vunpack.c.l.b16 %v617
      %v875 = vunpack.c.h.b16 %v617
      %v876 = vunpack.c.l.b16 %v618
      %v877 = vunpack.c.h.b16 %v618
      %v878 = vunpack.c.l.b16 %v619
      %v879 = vunpack.c.h.b16 %v619
      %v880 = vunpack.c.l.b16 %v620
      %v881 = vunpack.c.h.b16 %v620
      %v882 = vpack.c.b16 %v868, %v866
      %v883 = vpack.c.b16 %v869, %v867
      %v884 = vpack.c.b16 %v872, %v870
      %v885 = vpack.c.b16 %v873, %v871
      %v886 = vpack.c.b16 %v876, %v874
      %v887 = vpack.c.b16 %v877, %v875
      %v888 = vpack.c.b16 %v880, %v878
      %v889 = vpack.c.b16 %v881, %v879
      %vm898 = vcmask 523264
      %v900 = vsel %vm898, %v597, 0
      %v903 = vsel %vm898, %v598, 0
      %v906 = vsel %vm898, %v599, 0
      %v909 = vsel %vm898, %v600, 0
      %v912 = vsel %vm898, %v601, 0
      %v915 = vsel %vm898, %v602, 0
      %v918 = vsel %vm898, %v603, 0
      %v921 = vsel %vm898, %v604, 0
      %v924 = vsel %vm898, %v605, 0
      %v927 = vsel %vm898, %v606, 0
      %v930 = vsel %vm898, %v607, 0
      %v933 = vsel %vm898, %v608, 0
      %v936 = vsel %vm898, %v609, 0
      %v939 = vsel %vm898, %v610, 0
      %v942 = vsel %vm898, %v611, 0
      %v945 = vsel %vm898, %v612, 0
      %947 = vmatpush.bf16.msra.mxu0 0
      %948 = vmatpush.bf16.msra.mxu0 0
      %949 = vmatpush.bf16.msra.mxu0 0
      %950 = vmatpush.bf16.msra.mxu0 0
      %951 = vmatpush.bf16.msra.mxu0 %v888
      %952 = vmatpush.bf16.msra.mxu0 %v886
      %953 = vmatpush.bf16.msra.mxu0 %v884
      %954 = vmatpush.bf16.msra.mxu0 %v882
      %955 = vmatmul.bf16.gmra.mxu0 %v900
      %v956 = vpop.f32.mrf.mxu0
      %v957 = vadd.f32 %v690, %v956
      %v958 = vpop.f32.mrf.mxu0
      %v959 = vadd.f32 %v692, %v958
      %960 = vmatmul.bf16.gmra.mxu0 %v903
      %v961 = vpop.f32.mrf.mxu0
      %v962 = vadd.f32 %v695, %v961
      %v963 = vpop.f32.mrf.mxu0
      %v964 = vadd.f32 %v697, %v963
      %965 = vmatmul.bf16.gmra.mxu0 %v906
      %v966 = vpop.f32.mrf.mxu0
      %v967 = vadd.f32 %v700, %v966
      %v968 = vpop.f32.mrf.mxu0
      %v969 = vadd.f32 %v702, %v968
      %970 = vmatmul.bf16.gmra.mxu0 %v909
      %v971 = vpop.f32.mrf.mxu0
      %v972 = vadd.f32 %v705, %v971
      %v973 = vpop.f32.mrf.mxu0
      %v974 = vadd.f32 %v707, %v973
      %975 = vmatmul.bf16.gmra.mxu0 %v912
      %v976 = vpop.f32.mrf.mxu0
      %v977 = vadd.f32 %v710, %v976
      %v978 = vpop.f32.mrf.mxu0
      %v979 = vadd.f32 %v712, %v978
      %980 = vmatmul.bf16.gmra.mxu0 %v915
      %v981 = vpop.f32.mrf.mxu0
      %v982 = vadd.f32 %v715, %v981
      %v983 = vpop.f32.mrf.mxu0
      %v984 = vadd.f32 %v717, %v983
      %985 = vmatmul.bf16.gmra.mxu0 %v918
      %v986 = vpop.f32.mrf.mxu0
      %v987 = vadd.f32 %v720, %v986
      %v988 = vpop.f32.mrf.mxu0
      %v989 = vadd.f32 %v722, %v988
      %990 = vmatmul.bf16.gmra.mxu0 %v921
      %v991 = vpop.f32.mrf.mxu0
      %v992 = vadd.f32 %v725, %v991
      %v993 = vpop.f32.mrf.mxu0
      %v994 = vadd.f32 %v727, %v993
      %995 = vmatmul.bf16.gmra.mxu0 %v924
      %v996 = vpop.f32.mrf.mxu0
      %v997 = vadd.f32 %v730, %v996
      %v998 = vpop.f32.mrf.mxu0
      %v999 = vadd.f32 %v732, %v998
      %1000 = vmatmul.bf16.gmra.mxu0 %v927
      %v1001 = vpop.f32.mrf.mxu0
      %v1002 = vadd.f32 %v735, %v1001
      %v1003 = vpop.f32.mrf.mxu0
      %v1004 = vadd.f32 %v737, %v1003
      %1005 = vmatmul.bf16.gmra.mxu0 %v930
      %v1006 = vpop.f32.mrf.mxu0
      %v1007 = vadd.f32 %v740, %v1006
      %v1008 = vpop.f32.mrf.mxu0
      %v1009 = vadd.f32 %v742, %v1008
      %1010 = vmatmul.bf16.gmra.mxu0 %v933
      %v1011 = vpop.f32.mrf.mxu0
      %v1012 = vadd.f32 %v745, %v1011
      %v1013 = vpop.f32.mrf.mxu0
      %v1014 = vadd.f32 %v747, %v1013
      %1015 = vmatmul.bf16.gmra.mxu0 %v936
      %v1016 = vpop.f32.mrf.mxu0
      %v1017 = vadd.f32 %v750, %v1016
      %v1018 = vpop.f32.mrf.mxu0
      %v1019 = vadd.f32 %v752, %v1018
      %1020 = vmatmul.bf16.gmra.mxu0 %v939
      %v1021 = vpop.f32.mrf.mxu0
      %v1022 = vadd.f32 %v755, %v1021
      %v1023 = vpop.f32.mrf.mxu0
      %v1024 = vadd.f32 %v757, %v1023
      %1025 = vmatmul.bf16.gmra.mxu0 %v942
      %v1026 = vpop.f32.mrf.mxu0
      %v1027 = vadd.f32 %v760, %v1026
      %v1028 = vpop.f32.mrf.mxu0
      %v1029 = vadd.f32 %v762, %v1028
      %1030 = vmatmul.bf16.gmra.mxu0 %v945
      %v1031 = vpop.f32.mrf.mxu0
      %v1032 = vadd.f32 %v765, %v1031
      %v1033 = vpop.f32.mrf.mxu0
      %v1034 = vadd.f32 %v767, %v1033
      %1035 = vdwg.mxu0
      %1036 = vmatpush.bf16.msra.mxu0 0
      %1037 = vmatpush.bf16.msra.mxu0 0
      %1038 = vmatpush.bf16.msra.mxu0 0
      %1039 = vmatpush.bf16.msra.mxu0 0
      %1040 = vmatpush.bf16.msra.mxu0 %v889
      %1041 = vmatpush.bf16.msra.mxu0 %v887
      %1042 = vmatpush.bf16.msra.mxu0 %v885
      %1043 = vmatpush.bf16.msra.mxu0 %v883
      %1044 = vmatmul.bf16.gmra.mxu0 %v900
      %v1045 = vpop.f32.mrf.mxu0
      %v1046 = vadd.f32 %v779, %v1045
      %v1047 = vpop.f32.mrf.mxu0
      %v1048 = vadd.f32 %v781, %v1047
      %1049 = vmatmul.bf16.gmra.mxu0 %v903
      %v1050 = vpop.f32.mrf.mxu0
      %v1051 = vadd.f32 %v784, %v1050
      %v1052 = vpop.f32.mrf.mxu0
      %v1053 = vadd.f32 %v786, %v1052
      %1054 = vmatmul.bf16.gmra.mxu0 %v906
      %v1055 = vpop.f32.mrf.mxu0
      %v1056 = vadd.f32 %v789, %v1055
      %v1057 = vpop.f32.mrf.mxu0
      %v1058 = vadd.f32 %v791, %v1057
      %1059 = vmatmul.bf16.gmra.mxu0 %v909
      %v1060 = vpop.f32.mrf.mxu0
      %v1061 = vadd.f32 %v794, %v1060
      %v1062 = vpop.f32.mrf.mxu0
      %v1063 = vadd.f32 %v796, %v1062
      %1064 = vmatmul.bf16.gmra.mxu0 %v912
      %v1065 = vpop.f32.mrf.mxu0
      %v1066 = vadd.f32 %v799, %v1065
      %v1067 = vpop.f32.mrf.mxu0
      %v1068 = vadd.f32 %v801, %v1067
      %1069 = vmatmul.bf16.gmra.mxu0 %v915
      %v1070 = vpop.f32.mrf.mxu0
      %v1071 = vadd.f32 %v804, %v1070
      %v1072 = vpop.f32.mrf.mxu0
      %v1073 = vadd.f32 %v806, %v1072
      %1074 = vmatmul.bf16.gmra.mxu0 %v918
      %v1075 = vpop.f32.mrf.mxu0
      %v1076 = vadd.f32 %v809, %v1075
      %v1077 = vpop.f32.mrf.mxu0
      %v1078 = vadd.f32 %v811, %v1077
      %1079 = vmatmul.bf16.gmra.mxu0 %v921
      %v1080 = vpop.f32.mrf.mxu0
      %v1081 = vadd.f32 %v814, %v1080
      %v1082 = vpop.f32.mrf.mxu0
      %v1083 = vadd.f32 %v816, %v1082
      %1084 = vmatmul.bf16.gmra.mxu0 %v924
      %v1085 = vpop.f32.mrf.mxu0
      %v1086 = vadd.f32 %v819, %v1085
      %v1087 = vpop.f32.mrf.mxu0
      %v1088 = vadd.f32 %v821, %v1087
      %1089 = vmatmul.bf16.gmra.mxu0 %v927
      %v1090 = vpop.f32.mrf.mxu0
      %v1091 = vadd.f32 %v824, %v1090
      %v1092 = vpop.f32.mrf.mxu0
      %v1093 = vadd.f32 %v826, %v1092
      %1094 = vmatmul.bf16.gmra.mxu0 %v930
      %v1095 = vpop.f32.mrf.mxu0
      %v1096 = vadd.f32 %v829, %v1095
      %v1097 = vpop.f32.mrf.mxu0
      %v1098 = vadd.f32 %v831, %v1097
      %1099 = vmatmul.bf16.gmra.mxu0 %v933
      %v1100 = vpop.f32.mrf.mxu0
      %v1101 = vadd.f32 %v834, %v1100
      %v1102 = vpop.f32.mrf.mxu0
      %v1103 = vadd.f32 %v836, %v1102
      %1104 = vmatmul.bf16.gmra.mxu0 %v936
      %v1105 = vpop.f32.mrf.mxu0
      %v1106 = vadd.f32 %v839, %v1105
      %v1107 = vpop.f32.mrf.mxu0
      %v1108 = vadd.f32 %v841, %v1107
      %1109 = vmatmul.bf16.gmra.mxu0 %v939
      %v1110 = vpop.f32.mrf.mxu0
      %v1111 = vadd.f32 %v844, %v1110
      %v1112 = vpop.f32.mrf.mxu0
      %v1113 = vadd.f32 %v846, %v1112
      %1114 = vmatmul.bf16.gmra.mxu0 %v942
      %v1115 = vpop.f32.mrf.mxu0
      %v1116 = vadd.f32 %v849, %v1115
      %v1117 = vpop.f32.mrf.mxu0
      %v1118 = vadd.f32 %v851, %v1117
      %1119 = vmatmul.bf16.gmra.mxu0 %v945
      %v1120 = vpop.f32.mrf.mxu0
      %v1121 = vadd.f32 %v854, %v1120
      %v1122 = vpop.f32.mrf.mxu0
      %v1123 = vadd.f32 %v856, %v1122
      %1124 = vdwg.mxu0
      %s1125 = scalar_lea.vmem %s6, 1
      %v1126 = vld [vmem:[%s1125] ss:$4 sm:$0x3]
      %v1128 = vperm.slane %v1126, 0
      %v1129 = vperm.slane %v1126, 1
      %v1132 = vadd.f32 %v957, %v1128
      %v1133 = vadd.f32 %v1046, %v1129
      %v1134 = vadd.f32 %v959, %v1128
      %v1135 = vadd.f32 %v1048, %v1129
      %v1136 = vadd.f32 %v962, %v1128
      %v1137 = vadd.f32 %v1051, %v1129
      %v1138 = vadd.f32 %v964, %v1128
      %v1139 = vadd.f32 %v1053, %v1129
      %v1140 = vadd.f32 %v967, %v1128
      %v1141 = vadd.f32 %v1056, %v1129
      %v1142 = vadd.f32 %v969, %v1128
      %v1143 = vadd.f32 %v1058, %v1129
      %v1144 = vadd.f32 %v972, %v1128
      %v1145 = vadd.f32 %v1061, %v1129
      %v1146 = vadd.f32 %v974, %v1128
      %v1147 = vadd.f32 %v1063, %v1129
      %v1148 = vadd.f32 %v977, %v1128
      %v1149 = vadd.f32 %v1066, %v1129
      %v1150 = vadd.f32 %v979, %v1128
      %v1151 = vadd.f32 %v1068, %v1129
      %v1152 = vadd.f32 %v982, %v1128
      %v1153 = vadd.f32 %v1071, %v1129
      %v1154 = vadd.f32 %v984, %v1128
      %v1155 = vadd.f32 %v1073, %v1129
      %v1156 = vadd.f32 %v987, %v1128
      %v1157 = vadd.f32 %v1076, %v1129
      %v1158 = vadd.f32 %v989, %v1128
      %v1159 = vadd.f32 %v1078, %v1129
      %v1160 = vadd.f32 %v992, %v1128
      %v1161 = vadd.f32 %v1081, %v1129
      %v1162 = vadd.f32 %v994, %v1128
      %v1163 = vadd.f32 %v1083, %v1129
      %v1164 = vadd.f32 %v997, %v1128
      %v1165 = vadd.f32 %v1086, %v1129
      %v1166 = vadd.f32 %v999, %v1128
      %v1167 = vadd.f32 %v1088, %v1129
      %v1168 = vadd.f32 %v1002, %v1128
      %v1169 = vadd.f32 %v1091, %v1129
      %v1170 = vadd.f32 %v1004, %v1128
      %v1171 = vadd.f32 %v1093, %v1129
      %v1172 = vadd.f32 %v1007, %v1128
      %v1173 = vadd.f32 %v1096, %v1129
      %v1174 = vadd.f32 %v1009, %v1128
      %v1175 = vadd.f32 %v1098, %v1129
      %v1176 = vadd.f32 %v1012, %v1128
      %v1177 = vadd.f32 %v1101, %v1129
      %v1178 = vadd.f32 %v1014, %v1128
      %v1179 = vadd.f32 %v1103, %v1129
      %v1180 = vadd.f32 %v1017, %v1128
      %v1181 = vadd.f32 %v1106, %v1129
      %v1182 = vadd.f32 %v1019, %v1128
      %v1183 = vadd.f32 %v1108, %v1129
      %v1184 = vadd.f32 %v1022, %v1128
      %v1185 = vadd.f32 %v1111, %v1129
      %v1186 = vadd.f32 %v1024, %v1128
      %v1187 = vadd.f32 %v1113, %v1129
      %v1188 = vadd.f32 %v1027, %v1128
      %v1189 = vadd.f32 %v1116, %v1129
      %v1190 = vadd.f32 %v1029, %v1128
      %v1191 = vadd.f32 %v1118, %v1129
      %v1192 = vadd.f32 %v1032, %v1128
      %v1193 = vadd.f32 %v1121, %v1129
      %v1194 = vadd.f32 %v1034, %v1128
      %v1195 = vadd.f32 %v1123, %v1129
      %v1196 = vmax.f32 %v1132, 0.0
      %v1197 = vmax.f32 %v1133, 0.0
      %v1198 = vmax.f32 %v1134, 0.0
      %v1199 = vmax.f32 %v1135, 0.0
      %v1200 = vmax.f32 %v1136, 0.0
      %v1201 = vmax.f32 %v1137, 0.0
      %v1202 = vmax.f32 %v1138, 0.0
      %v1203 = vmax.f32 %v1139, 0.0
      %v1204 = vmax.f32 %v1140, 0.0
      %v1205 = vmax.f32 %v1141, 0.0
      %v1206 = vmax.f32 %v1142, 0.0
      %v1207 = vmax.f32 %v1143, 0.0
      %v1208 = vmax.f32 %v1144, 0.0
      %v1209 = vmax.f32 %v1145, 0.0
      %v1210 = vmax.f32 %v1146, 0.0
      %v1211 = vmax.f32 %v1147, 0.0
      %v1212 = vmax.f32 %v1148, 0.0
      %v1213 = vmax.f32 %v1149, 0.0
      %v1214 = vmax.f32 %v1150, 0.0
      %v1215 = vmax.f32 %v1151, 0.0
      %v1216 = vmax.f32 %v1152, 0.0
      %v1217 = vmax.f32 %v1153, 0.0
      %v1218 = vmax.f32 %v1154, 0.0
      %v1219 = vmax.f32 %v1155, 0.0
      %v1220 = vmax.f32 %v1156, 0.0
      %v1221 = vmax.f32 %v1157, 0.0
      %v1222 = vmax.f32 %v1158, 0.0
      %v1223 = vmax.f32 %v1159, 0.0
      %v1224 = vmax.f32 %v1160, 0.0
      %v1225 = vmax.f32 %v1161, 0.0
      %v1226 = vmax.f32 %v1162, 0.0
      %v1227 = vmax.f32 %v1163, 0.0
      %v1228 = vmax.f32 %v1164, 0.0
      %v1229 = vmax.f32 %v1165, 0.0
      %v1230 = vmax.f32 %v1166, 0.0
      %v1231 = vmax.f32 %v1167, 0.0
      %v1232 = vmax.f32 %v1168, 0.0
      %v1233 = vmax.f32 %v1169, 0.0
      %v1234 = vmax.f32 %v1170, 0.0
      %v1235 = vmax.f32 %v1171, 0.0
      %v1236 = vmax.f32 %v1172, 0.0
      %v1237 = vmax.f32 %v1173, 0.0
      %v1238 = vmax.f32 %v1174, 0.0
      %v1239 = vmax.f32 %v1175, 0.0
      %v1240 = vmax.f32 %v1176, 0.0
      %v1241 = vmax.f32 %v1177, 0.0
      %v1242 = vmax.f32 %v1178, 0.0
      %v1243 = vmax.f32 %v1179, 0.0
      %v1244 = vmax.f32 %v1180, 0.0
      %v1245 = vmax.f32 %v1181, 0.0
      %v1246 = vmax.f32 %v1182, 0.0
      %v1247 = vmax.f32 %v1183, 0.0
      %v1248 = vmax.f32 %v1184, 0.0
      %v1249 = vmax.f32 %v1185, 0.0
      %v1250 = vmax.f32 %v1186, 0.0
      %v1251 = vmax.f32 %v1187, 0.0
      %v1252 = vmax.f32 %v1188, 0.0
      %v1253 = vmax.f32 %v1189, 0.0
      %v1254 = vmax.f32 %v1190, 0.0
      %v1255 = vmax.f32 %v1191, 0.0
      %v1256 = vmax.f32 %v1192, 0.0
      %v1257 = vmax.f32 %v1193, 0.0
      %v1258 = vmax.f32 %v1194, 0.0
      %v1259 = vmax.f32 %v1195, 0.0
      %v1260 = vpack.c.bf16 %v1198, %v1196
      %v1261 = vpack.c.bf16 %v1199, %v1197
      %v1262 = vpack.c.bf16 %v1202, %v1200
      %v1263 = vpack.c.bf16 %v1203, %v1201
      %v1264 = vpack.c.bf16 %v1206, %v1204
      %v1265 = vpack.c.bf16 %v1207, %v1205
      %v1266 = vpack.c.bf16 %v1210, %v1208
      %v1267 = vpack.c.bf16 %v1211, %v1209
      %v1268 = vpack.c.bf16 %v1214, %v1212
      %v1269 = vpack.c.bf16 %v1215, %v1213
      %v1270 = vpack.c.bf16 %v1218, %v1216
      %v1271 = vpack.c.bf16 %v1219, %v1217
      %v1272 = vpack.c.bf16 %v1222, %v1220
      %v1273 = vpack.c.bf16 %v1223, %v1221
      %v1274 = vpack.c.bf16 %v1226, %v1224
      %v1275 = vpack.c.bf16 %v1227, %v1225
      %v1276 = vpack.c.bf16 %v1230, %v1228
      %v1277 = vpack.c.bf16 %v1231, %v1229
      %v1278 = vpack.c.bf16 %v1234, %v1232
      %v1279 = vpack.c.bf16 %v1235, %v1233
      %v1280 = vpack.c.bf16 %v1238, %v1236
      %v1281 = vpack.c.bf16 %v1239, %v1237
      %v1282 = vpack.c.bf16 %v1242, %v1240
      %v1283 = vpack.c.bf16 %v1243, %v1241
      %v1284 = vpack.c.bf16 %v1246, %v1244
      %v1285 = vpack.c.bf16 %v1247, %v1245
      %v1286 = vpack.c.bf16 %v1250, %v1248
      %v1287 = vpack.c.bf16 %v1251, %v1249
      %v1288 = vpack.c.bf16 %v1254, %v1252
      %v1289 = vpack.c.bf16 %v1255, %v1253
      %v1290 = vpack.c.bf16 %v1258, %v1256
      %v1291 = vpack.c.bf16 %v1259, %v1257
      %v1292 = vld [vmem:[%s5] sm:$0xf]
      %v1293 = vld [vmem:[%s5 + $0x4] sm:$0xf]
      %v1294 = vld [vmem:[%s5 + $0x8] sm:$0xf]
      %v1295 = vld [vmem:[%s5 + $0xc] sm:$0xf]
      %v1296 = vld [vmem:[%s5 + $0x10] sm:$0xf]
      %v1297 = vld [vmem:[%s5 + $0x14] sm:$0xf]
      %v1298 = vld [vmem:[%s5 + $0x18] sm:$0xf]
      %v1299 = vld [vmem:[%s5 + $0x1c] sm:$0xf]
      %v1300 = vld [vmem:[%s5 + $0x20] sm:$0xf]
      %v1301 = vld [vmem:[%s5 + $0x24] sm:$0xf]
      %v1302 = vld [vmem:[%s5 + $0x28] sm:$0xf]
      %v1303 = vld [vmem:[%s5 + $0x2c] sm:$0xf]
      %v1304 = vld [vmem:[%s5 + $0x30] sm:$0xf]
      %v1305 = vld [vmem:[%s5 + $0x34] sm:$0xf]
      %v1306 = vld [vmem:[%s5 + $0x38] sm:$0xf]
      %v1307 = vld [vmem:[%s5 + $0x3c] sm:$0xf]
      %v1308 = vld [vmem:[%s5 + $0x40] sm:$0xf]
      %v1309 = vld [vmem:[%s5 + $0x44] sm:$0xf]
      %v1310 = vld [vmem:[%s5 + $0x48] sm:$0xf]
      %v1311 = vld [vmem:[%s5 + $0x4c] sm:$0xf]
      %v1312 = vld [vmem:[%s5 + $0x50] sm:$0xf]
      %v1313 = vld [vmem:[%s5 + $0x54] sm:$0xf]
      %v1314 = vld [vmem:[%s5 + $0x58] sm:$0xf]
      %v1315 = vld [vmem:[%s5 + $0x5c] sm:$0xf]
      %v1316 = vld [vmem:[%s5 + $0x60] sm:$0xf]
      %v1317 = vld [vmem:[%s5 + $0x64] sm:$0xf]
      %v1318 = vld [vmem:[%s5 + $0x68] sm:$0xf]
      %v1319 = vld [vmem:[%s5 + $0x6c] sm:$0xf]
      %v1320 = vld [vmem:[%s5 + $0x70] sm:$0xf]
      %v1321 = vld [vmem:[%s5 + $0x74] sm:$0xf]
      %v1322 = vld [vmem:[%s5 + $0x78] sm:$0xf]
      %v1323 = vld [vmem:[%s5 + $0x7c] sm:$0xf]
      %v1324 = vld [vmem:[%s6 + $0x2] sm:$0x1]
      %v1325 = vperm.slane %v1324, 0
      %v1358 = vunpack.c.l.b16 %v1292
      %v1359 = vunpack.c.l.b16 %v1293
      %v1360 = vunpack.c.l.b16 %v1294
      %v1361 = vunpack.c.l.b16 %v1295
      %v1362 = vunpack.c.l.b16 %v1296
      %v1363 = vunpack.c.l.b16 %v1297
      %v1364 = vunpack.c.l.b16 %v1298
      %v1365 = vunpack.c.l.b16 %v1299
      %v1366 = vunpack.c.l.b16 %v1300
      %v1367 = vunpack.c.l.b16 %v1301
      %v1368 = vunpack.c.l.b16 %v1302
      %v1369 = vunpack.c.l.b16 %v1303
      %v1370 = vunpack.c.l.b16 %v1304
      %v1371 = vunpack.c.l.b16 %v1305
      %v1372 = vunpack.c.l.b16 %v1306
      %v1373 = vunpack.c.l.b16 %v1307
      %v1374 = vunpack.c.l.b16 %v1308
      %v1375 = vunpack.c.l.b16 %v1309
      %v1376 = vunpack.c.l.b16 %v1310
      %v1377 = vunpack.c.l.b16 %v1311
      %v1378 = vunpack.c.l.b16 %v1312
      %v1379 = vunpack.c.l.b16 %v1313
      %v1380 = vunpack.c.l.b16 %v1314
      %v1381 = vunpack.c.l.b16 %v1315
      %v1382 = vunpack.c.l.b16 %v1316
      %v1383 = vunpack.c.l.b16 %v1317
      %v1384 = vunpack.c.l.b16 %v1318
      %v1385 = vunpack.c.l.b16 %v1319
      %v1386 = vunpack.c.l.b16 %v1320
      %v1387 = vunpack.c.l.b16 %v1321
      %v1388 = vunpack.c.l.b16 %v1322
      %v1389 = vunpack.c.l.b16 %v1323
      %v1390 = vpack.c.b16 %v1359, %v1358
      %v1391 = vpack.c.b16 %v1361, %v1360
      %v1392 = vpack.c.b16 %v1363, %v1362
      %v1393 = vpack.c.b16 %v1365, %v1364
      %v1394 = vpack.c.b16 %v1367, %v1366
      %v1395 = vpack.c.b16 %v1369, %v1368
      %v1396 = vpack.c.b16 %v1371, %v1370
      %v1397 = vpack.c.b16 %v1373, %v1372
      %v1398 = vpack.c.b16 %v1375, %v1374
      %v1399 = vpack.c.b16 %v1377, %v1376
      %v1400 = vpack.c.b16 %v1379, %v1378
      %v1401 = vpack.c.b16 %v1381, %v1380
      %v1402 = vpack.c.b16 %v1383, %v1382
      %v1403 = vpack.c.b16 %v1385, %v1384
      %v1404 = vpack.c.b16 %v1387, %v1386
      %v1405 = vpack.c.b16 %v1389, %v1388
      %1422 = vmatpush.bf16.msra.mxu0 %v1397
      %1423 = vmatpush.bf16.msra.mxu0 %v1396
      %1424 = vmatpush.bf16.msra.mxu0 %v1395
      %1425 = vmatpush.bf16.msra.mxu0 %v1394
      %1426 = vmatpush.bf16.msra.mxu0 %v1393
      %1427 = vmatpush.bf16.msra.mxu0 %v1392
      %1428 = vmatpush.bf16.msra.mxu0 %v1391
      %1429 = vmatpush.bf16.msra.mxu0 %v1390
      %1430 = vmatmul.bf16.gmra.mxu0 %v1260
      %v1431 = vpop.f32.mrf.mxu0
      %v1432 = vadd.f32 %v1325, %v1431
      %v1433 = vpop.f32.mrf.mxu0
      %v1434 = vadd.f32 %v1325, %v1433
      %1435 = vmatmul.bf16.gmra.mxu0 %v1262
      %v1436 = vpop.f32.mrf.mxu0
      %v1437 = vadd.f32 %v1325, %v1436
      %v1438 = vpop.f32.mrf.mxu0
      %v1439 = vadd.f32 %v1325, %v1438
      %1440 = vmatmul.bf16.gmra.mxu0 %v1264
      %v1441 = vpop.f32.mrf.mxu0
      %v1442 = vadd.f32 %v1325, %v1441
      %v1443 = vpop.f32.mrf.mxu0
      %v1444 = vadd.f32 %v1325, %v1443
      %1445 = vmatmul.bf16.gmra.mxu0 %v1266
      %v1446 = vpop.f32.mrf.mxu0
      %v1447 = vadd.f32 %v1325, %v1446
      %v1448 = vpop.f32.mrf.mxu0
      %v1449 = vadd.f32 %v1325, %v1448
      %1450 = vmatmul.bf16.gmra.mxu0 %v1268
      %v1451 = vpop.f32.mrf.mxu0
      %v1452 = vadd.f32 %v1325, %v1451
      %v1453 = vpop.f32.mrf.mxu0
      %v1454 = vadd.f32 %v1325, %v1453
      %1455 = vmatmul.bf16.gmra.mxu0 %v1270
      %v1456 = vpop.f32.mrf.mxu0
      %v1457 = vadd.f32 %v1325, %v1456
      %v1458 = vpop.f32.mrf.mxu0
      %v1459 = vadd.f32 %v1325, %v1458
      %1460 = vmatmul.bf16.gmra.mxu0 %v1272
      %v1461 = vpop.f32.mrf.mxu0
      %v1462 = vadd.f32 %v1325, %v1461
      %v1463 = vpop.f32.mrf.mxu0
      %v1464 = vadd.f32 %v1325, %v1463
      %1465 = vmatmul.bf16.gmra.mxu0 %v1274
      %v1466 = vpop.f32.mrf.mxu0
      %v1467 = vadd.f32 %v1325, %v1466
      %v1468 = vpop.f32.mrf.mxu0
      %v1469 = vadd.f32 %v1325, %v1468
      %1470 = vmatmul.bf16.gmra.mxu0 %v1276
      %v1471 = vpop.f32.mrf.mxu0
      %v1472 = vadd.f32 %v1325, %v1471
      %v1473 = vpop.f32.mrf.mxu0
      %v1474 = vadd.f32 %v1325, %v1473
      %1475 = vmatmul.bf16.gmra.mxu0 %v1278
      %v1476 = vpop.f32.mrf.mxu0
      %v1477 = vadd.f32 %v1325, %v1476
      %v1478 = vpop.f32.mrf.mxu0
      %v1479 = vadd.f32 %v1325, %v1478
      %1480 = vmatmul.bf16.gmra.mxu0 %v1280
      %v1481 = vpop.f32.mrf.mxu0
      %v1482 = vadd.f32 %v1325, %v1481
      %v1483 = vpop.f32.mrf.mxu0
      %v1484 = vadd.f32 %v1325, %v1483
      %1485 = vmatmul.bf16.gmra.mxu0 %v1282
      %v1486 = vpop.f32.mrf.mxu0
      %v1487 = vadd.f32 %v1325, %v1486
      %v1488 = vpop.f32.mrf.mxu0
      %v1489 = vadd.f32 %v1325, %v1488
      %1490 = vmatmul.bf16.gmra.mxu0 %v1284
      %v1491 = vpop.f32.mrf.mxu0
      %v1492 = vadd.f32 %v1325, %v1491
      %v1493 = vpop.f32.mrf.mxu0
      %v1494 = vadd.f32 %v1325, %v1493
      %1495 = vmatmul.bf16.gmra.mxu0 %v1286
      %v1496 = vpop.f32.mrf.mxu0
      %v1497 = vadd.f32 %v1325, %v1496
      %v1498 = vpop.f32.mrf.mxu0
      %v1499 = vadd.f32 %v1325, %v1498
      %1500 = vmatmul.bf16.gmra.mxu0 %v1288
      %v1501 = vpop.f32.mrf.mxu0
      %v1502 = vadd.f32 %v1325, %v1501
      %v1503 = vpop.f32.mrf.mxu0
      %v1504 = vadd.f32 %v1325, %v1503
      %1505 = vmatmul.bf16.gmra.mxu0 %v1290
      %v1506 = vpop.f32.mrf.mxu0
      %v1507 = vadd.f32 %v1325, %v1506
      %v1508 = vpop.f32.mrf.mxu0
      %v1509 = vadd.f32 %v1325, %v1508
      %1510 = vdwg.mxu0
      %1511 = vmatpush.bf16.msra.mxu0 %v1405
      %1512 = vmatpush.bf16.msra.mxu0 %v1404
      %1513 = vmatpush.bf16.msra.mxu0 %v1403
      %1514 = vmatpush.bf16.msra.mxu0 %v1402
      %1515 = vmatpush.bf16.msra.mxu0 %v1401
      %1516 = vmatpush.bf16.msra.mxu0 %v1400
      %1517 = vmatpush.bf16.msra.mxu0 %v1399
      %1518 = vmatpush.bf16.msra.mxu0 %v1398
      %1519 = vmatmul.bf16.gmra.mxu0 %v1261
      %v1520 = vpop.f32.mrf.mxu0
      %v1521 = vadd.f32 %v1432, %v1520
      %v1522 = vpop.f32.mrf.mxu0
      %v1523 = vadd.f32 %v1434, %v1522
      %1524 = vmatmul.bf16.gmra.mxu0 %v1263
      %v1525 = vpop.f32.mrf.mxu0
      %v1526 = vadd.f32 %v1437, %v1525
      %v1527 = vpop.f32.mrf.mxu0
      %v1528 = vadd.f32 %v1439, %v1527
      %1529 = vmatmul.bf16.gmra.mxu0 %v1265
      %v1530 = vpop.f32.mrf.mxu0
      %v1531 = vadd.f32 %v1442, %v1530
      %v1532 = vpop.f32.mrf.mxu0
      %v1533 = vadd.f32 %v1444, %v1532
      %1534 = vmatmul.bf16.gmra.mxu0 %v1267
      %v1535 = vpop.f32.mrf.mxu0
      %v1536 = vadd.f32 %v1447, %v1535
      %v1537 = vpop.f32.mrf.mxu0
      %v1538 = vadd.f32 %v1449, %v1537
      %1539 = vmatmul.bf16.gmra.mxu0 %v1269
      %v1540 = vpop.f32.mrf.mxu0
      %v1541 = vadd.f32 %v1452, %v1540
      %v1542 = vpop.f32.mrf.mxu0
      %v1543 = vadd.f32 %v1454, %v1542
      %1544 = vmatmul.bf16.gmra.mxu0 %v1271
      %v1545 = vpop.f32.mrf.mxu0
      %v1546 = vadd.f32 %v1457, %v1545
      %v1547 = vpop.f32.mrf.mxu0
      %v1548 = vadd.f32 %v1459, %v1547
      %1549 = vmatmul.bf16.gmra.mxu0 %v1273
      %v1550 = vpop.f32.mrf.mxu0
      %v1551 = vadd.f32 %v1462, %v1550
      %v1552 = vpop.f32.mrf.mxu0
      %v1553 = vadd.f32 %v1464, %v1552
      %1554 = vmatmul.bf16.gmra.mxu0 %v1275
      %v1555 = vpop.f32.mrf.mxu0
      %v1556 = vadd.f32 %v1467, %v1555
      %v1557 = vpop.f32.mrf.mxu0
      %v1558 = vadd.f32 %v1469, %v1557
      %1559 = vmatmul.bf16.gmra.mxu0 %v1277
      %v1560 = vpop.f32.mrf.mxu0
      %v1561 = vadd.f32 %v1472, %v1560
      %v1562 = vpop.f32.mrf.mxu0
      %v1563 = vadd.f32 %v1474, %v1562
      %1564 = vmatmul.bf16.gmra.mxu0 %v1279
      %v1565 = vpop.f32.mrf.mxu0
      %v1566 = vadd.f32 %v1477, %v1565
      %v1567 = vpop.f32.mrf.mxu0
      %v1568 = vadd.f32 %v1479, %v1567
      %1569 = vmatmul.bf16.gmra.mxu0 %v1281
      %v1570 = vpop.f32.mrf.mxu0
      %v1571 = vadd.f32 %v1482, %v1570
      %v1572 = vpop.f32.mrf.mxu0
      %v1573 = vadd.f32 %v1484, %v1572
      %1574 = vmatmul.bf16.gmra.mxu0 %v1283
      %v1575 = vpop.f32.mrf.mxu0
      %v1576 = vadd.f32 %v1487, %v1575
      %v1577 = vpop.f32.mrf.mxu0
      %v1578 = vadd.f32 %v1489, %v1577
      %1579 = vmatmul.bf16.gmra.mxu0 %v1285
      %v1580 = vpop.f32.mrf.mxu0
      %v1581 = vadd.f32 %v1492, %v1580
      %v1582 = vpop.f32.mrf.mxu0
      %v1583 = vadd.f32 %v1494, %v1582
      %1584 = vmatmul.bf16.gmra.mxu0 %v1287
      %v1585 = vpop.f32.mrf.mxu0
      %v1586 = vadd.f32 %v1497, %v1585
      %v1587 = vpop.f32.mrf.mxu0
      %v1588 = vadd.f32 %v1499, %v1587
      %1589 = vmatmul.bf16.gmra.mxu0 %v1289
      %v1590 = vpop.f32.mrf.mxu0
      %v1591 = vadd.f32 %v1502, %v1590
      %v1592 = vpop.f32.mrf.mxu0
      %v1593 = vadd.f32 %v1504, %v1592
      %1594 = vmatmul.bf16.gmra.mxu0 %v1291
      %v1595 = vpop.f32.mrf.mxu0
      %v1596 = vadd.f32 %v1507, %v1595
      %v1597 = vpop.f32.mrf.mxu0
      %v1598 = vadd.f32 %v1509, %v1597
      %1599 = vdwg.mxu0
      %vm1600 = vcmask 64512
      %1601 = vst.msk [vmem:[%s302] sm:$0xff] %vm1600, %v1521
      %1602 = vst.msk [vmem:[%s302 + $0x8] sm:$0xff] %vm1600, %v1523
      %1603 = vst.msk [vmem:[%s302 + $0x10] sm:$0xff] %vm1600, %v1526
      %1604 = vst.msk [vmem:[%s302 + $0x18] sm:$0xff] %vm1600, %v1528
      %1605 = vst.msk [vmem:[%s302 + $0x20] sm:$0xff] %vm1600, %v1531
      %1606 = vst.msk [vmem:[%s302 + $0x28] sm:$0xff] %vm1600, %v1533
      %1607 = vst.msk [vmem:[%s302 + $0x30] sm:$0xff] %vm1600, %v1536
      %1608 = vst.msk [vmem:[%s302 + $0x38] sm:$0xff] %vm1600, %v1538
      %1609 = vst.msk [vmem:[%s302 + $0x40] sm:$0xff] %vm1600, %v1541
      %1610 = vst.msk [vmem:[%s302 + $0x48] sm:$0xff] %vm1600, %v1543
      %1611 = vst.msk [vmem:[%s302 + $0x50] sm:$0xff] %vm1600, %v1546
      %1612 = vst.msk [vmem:[%s302 + $0x58] sm:$0xff] %vm1600, %v1548
      %1613 = vst.msk [vmem:[%s302 + $0x60] sm:$0xff] %vm1600, %v1551
      %1614 = vst.msk [vmem:[%s302 + $0x68] sm:$0xff] %vm1600, %v1553
      %1615 = vst.msk [vmem:[%s302 + $0x70] sm:$0xff] %vm1600, %v1556
      %1616 = vst.msk [vmem:[%s302 + $0x78] sm:$0xff] %vm1600, %v1558
      %1617 = vst.msk [vmem:[%s302 + $0x80] sm:$0xff] %vm1600, %v1561
      %1618 = vst.msk [vmem:[%s302 + $0x88] sm:$0xff] %vm1600, %v1563
      %1619 = vst.msk [vmem:[%s302 + $0x90] sm:$0xff] %vm1600, %v1566
      %1620 = vst.msk [vmem:[%s302 + $0x98] sm:$0xff] %vm1600, %v1568
      %1621 = vst.msk [vmem:[%s302 + $0xa0] sm:$0xff] %vm1600, %v1571
      %1622 = vst.msk [vmem:[%s302 + $0xa8] sm:$0xff] %vm1600, %v1573
      %1623 = vst.msk [vmem:[%s302 + $0xb0] sm:$0xff] %vm1600, %v1576
      %1624 = vst.msk [vmem:[%s302 + $0xb8] sm:$0xff] %vm1600, %v1578
      %1625 = vst.msk [vmem:[%s302 + $0xc0] sm:$0xff] %vm1600, %v1581
      %1626 = vst.msk [vmem:[%s302 + $0xc8] sm:$0xff] %vm1600, %v1583
      %1627 = vst.msk [vmem:[%s302 + $0xd0] sm:$0xff] %vm1600, %v1586
      %1628 = vst.msk [vmem:[%s302 + $0xd8] sm:$0xff] %vm1600, %v1588
      %1629 = vst.msk [vmem:[%s302 + $0xe0] sm:$0xff] %vm1600, %v1591
      %1630 = vst.msk [vmem:[%s302 + $0xe8] sm:$0xff] %vm1600, %v1593
      %1631 = vst.msk [vmem:[%s302 + $0xf0] sm:$0xff] %vm1600, %v1596
      %1632 = vst.msk [vmem:[%s302 + $0xf8] sm:$0xff] %vm1600, %v1598
      %s1633 = smul.u32 32, %s18
      %p1634 = scmp.lt.s32.totalorder %s1633, 63
      %s1635 = scalar_select %p1634, %s1633, 63
      %s1636 = smul.addr %s1635, 8
      %s1637 = scalar_lea.vmem %s7, %s1636
      // Predicated region
      $region49: #{joint_critic_forward.1} parent=47 // pred_check
        %p1638 = pneg %p193
      $region50: #{joint_critic_forward.1} parent=47 // pred_check_branch
        %1640 = sbr.rel (%p1638) target = $region52
      $region51: #{joint_critic_forward.1} parent=47 // pred_region
        %s1641 = smul.u32 32, %s18
      $region52: #{joint_critic_forward.1} parent=47 // pred_fallthru
        _
    $region48: #{joint_critic_forward.1} parent=5 // pred_fallthru
      _
    %p1642 = scmp.le.s32.totalorder 2, %s13
    // Predicated region
    $region53: #{joint_critic_forward.1} parent=5 // pred_check
      %p1643 = pneg %p1642
    $region54: #{joint_critic_forward.1} parent=5 // pred_check_branch
      %1645 = sbr.rel (%p1643) target = $region56
    $region55: #{joint_critic_forward.1} parent=5 // pred_region
      %s1646 = ssub.s32 %s13, 2
      // Predicated region
      $region57: #{joint_critic_forward.1} parent=55 // pred_check
        %p1647 = pneg %p199
      $region58: #{joint_critic_forward.1} parent=55 // pred_check_branch
        %1649 = sbr.rel (%p1647) target = $region60
      $region59: #{joint_critic_forward.1} parent=55 // pred_region
        %s1650 = smul.u32 32, %s19
        %p1651 = scmp.lt.s32.totalorder %s1650, 63
        %s1652 = scalar_select %p1651, %s1650, 63
        %s1653 = smul.addr %s1652, 8
        %s1654 = scalar_lea.vmem %s7, %s1653
      $region60: #{joint_critic_forward.1} parent=55 // pred_fallthru
        _
    $region56: #{joint_critic_forward.1} parent=5 // pred_fallthru
      _
  $region6: #{joint_critic_forward.1} parent=0 // loop_footer
    %s17 = sadd.s32 1, %s13
  $region7: #{joint_critic_forward.1} parent=0 // loop_footer_branch
    %12 = sbr.rel target = $region3
  $region8: #{joint_critic_forward.1} parent=0 // loop_exit
    _

</llo_original>
